<compile_context>
chip_gen: v7x
topology: tpu7x:2x2x1
jax: 0.10.0
libtpu: 0.0.40
codegen_flags: <defaults>
</compile_context>

<pallas_src>
import jax
import jax.numpy as jnp
from jax.experimental import pallas as pl
from jax.experimental.pallas import tpu as pltpu

N_HIDDEN = 8
N_WINDOW = 10


def _round_up(x, m):
    return (x + m - 1) // m * m


# --------------------------------- kernel ------------------------------------------------------
def tranad_kernel(src_ref, w_enc1_ref, w_enc2_ref, w_deca_ref, w_decb_ref,
                  w_fcn_ref, bias_ref, rep_ref, x1_ref, x2_ref):
    f32 = jnp.float32
    Fe = x1_ref.shape[1]              # feats
    H = w_enc1_ref.shape[2]           # n_hidden = 8
    F2 = w_decb_ref.shape[2]          # 2 * feats

    src = src_ref[...]                # (TB, W*F)  -- flattened window, w-major

    a_src = w_enc1_ref[0]             # (W*F, H)  encoder first linear, src part
    a_c = w_enc1_ref[1]               # (W*F, H)  encoder first linear, c part
    w_e2 = w_enc2_ref[...]            # (H, n)
    w_f = w_fcn_ref[...]              # (2F, F)
    rep = rep_ref[...]                # (F, W*F)  replication matrix (tile x1 over window)

    b_e1 = bias_ref[0:1, 0:H]
    b_e2 = bias_ref[1:2, :]
    b_d1a = bias_ref[2:3, 0:H]
    b_d1b = bias_ref[3:4, 0:F2]
    b_d2a = bias_ref[4:5, 0:H]
    b_d2b = bias_ref[5:6, 0:F2]
    b_f = bias_ref[6:7, 0:Fe]

    def head(h, wa, ba, wb, bb):
        # h: (TB, H) = ReLU of the encoder's first linear
        e = jnp.maximum(jnp.dot(h, w_e2, preferred_element_type=f32) + b_e2, 0.0)   # (TB, n)
        d = jnp.maximum(jnp.dot(e, wa, preferred_element_type=f32) + ba, 0.0)        # (TB, H)
        o = jnp.maximum(jnp.dot(d, wb, preferred_element_type=f32) + bb, 0.0)        # (TB, 2F)
        return jax.nn.sigmoid(jnp.dot(o, w_f, preferred_element_type=f32) + b_f)     # (TB, F)

    # ---- pass 1: c = 0, so only the src-half of the encoder's first weight contributes --------
    h1 = jnp.maximum(jnp.dot(src, a_src, preferred_element_type=f32) + b_e1, 0.0)    # (TB, H)
    x1 = head(h1, w_deca_ref[0], b_d1a, w_decb_ref[0], b_d1b)                        # (TB, F)

    # ---- pass 2: c = (x1 - src)^2 broadcast over the W window positions -----------------------
    x1_rep = jnp.dot(x1, rep, preferred_element_type=f32)                            # (TB, W*F)
    diff = x1_rep - src
    c = diff * diff
    h2 = jnp.maximum(jnp.dot(src, a_src, preferred_element_type=f32)
                     + jnp.dot(c, a_c, preferred_element_type=f32) + b_e1, 0.0)       # (TB, H)
    x2 = head(h2, w_deca_ref[1], b_d2a, w_decb_ref[1], b_d2b)                        # (TB, F)

    x1_ref[...] = x1
    x2_ref[...] = x2


# --------------------------------- wrapper -----------------------------------------------------
def tranad_transformer_forward(src, tgt, kparams, tile_b=256):
    """src: (W, B, F) float32; tgt is unused by the module's forward (kept for API parity)."""
    del tgt  # TODO(synk): the PyTorch module's forward never reads tgt; output is independent of it.
    W, B, Fe = src.shape
    WF = W * Fe

    # flatten exactly like src.permute(1,0,2).flatten(1) on the src half (plain XLA, outside kernel)
    src_flat = jnp.transpose(src, (1, 0, 2)).reshape(B, WF).astype(jnp.float32)

    tb = min(tile_b, _round_up(B, 8))
    Bp = _round_up(B, tb)
    if Bp != B:
        src_flat = jnp.pad(src_flat, ((0, Bp - B), (0, 0)))

    def full_spec(a):
        nd = a.ndim
        return pl.BlockSpec(a.shape, lambda b, _nd=nd: (0,) * _nd)

    in_specs = [pl.BlockSpec((tb, WF), lambda b: (b, 0))] + [full_spec(a) for a in kparams]
    out_specs = [pl.BlockSpec((tb, Fe), lambda b: (b, 0)),
                 pl.BlockSpec((tb, Fe), lambda b: (b, 0))]
    out_shape = (jax.ShapeDtypeStruct((Bp, Fe), jnp.float32),
                 jax.ShapeDtypeStruct((Bp, Fe), jnp.float32))

    x1p, x2p = pl.pallas_call(
        tranad_kernel,
        out_shape=out_shape,
        grid_spec=pltpu.PrefetchScalarGridSpec(
            num_scalar_prefetch=0,
            grid=(Bp // tb,),
            in_specs=in_specs,
            out_specs=out_specs,
        ),
        compiler_params=pltpu.CompilerParams(dimension_semantics=("parallel",)),
    )(src_flat, *kparams)

    x1 = x1p[:B][None, :, :]   # (1, B, F), matching the module's return layout
    x2 = x2p[:B][None, :, :]
    return x1, x2


# --------------------------------- parameter setup (plain JAX glue) -----------------------------
def init_params(key, feats):
    H, W = N_HIDDEN, N_WINDOW
    n = 2 * feats * W
    ks = jax.random.split(key, 14)

    def w(k, shape, scale=0.2):
        return (scale * jax.random.normal(k, shape)).astype(jnp.float32)

    return {
        "enc_w1": w(ks[0], (H, n)), "enc_b1": w(ks[1], (H,), 0.1),
        "enc_w2": w(ks[2], (n, H)), "enc_b2": w(ks[3], (n,), 0.1),
        "dec1_w1": w(ks[4], (H, n)), "dec1_b1": w(ks[5], (H,), 0.1),
        "dec1_w2": w(ks[6], (2 * feats, H)), "dec1_b2": w(ks[7], (2 * feats,), 0.1),
        "dec2_w1": w(ks[8], (H, n)), "dec2_b1": w(ks[9], (H,), 0.1),
        "dec2_w2": w(ks[10], (2 * feats, H)), "dec2_b2": w(ks[11], (2 * feats,), 0.1),
        "fcn_w": w(ks[12], (feats, 2 * feats)), "fcn_b": w(ks[13], (feats,), 0.1),
    }


def pack_for_kernel(p, feats):
    """Pack the 15 PyTorch tensors into 7 (in,out)-layout slabs for the kernel."""
    H, W = N_HIDDEN, N_WINDOW
    n = 2 * feats * W
    WF = W * feats

    # encoder first linear: columns are laid out [w][src F | c F]; split the two halves
    e1 = p["enc_w1"].reshape(H, W, 2, feats)
    a_src = e1[:, :, 0, :].reshape(H, WF).T            # (WF, H)
    a_c = e1[:, :, 1, :].reshape(H, WF).T              # (WF, H)
    w_enc1 = jnp.stack([a_src, a_c], axis=0)           # (2, WF, H)

    w_enc2 = p["enc_w2"].T                             # (H, n)
    w_deca = jnp.stack([p["dec1_w1"].T, p["dec2_w1"].T], axis=0)   # (2, n, H)
    w_decb = jnp.stack([p["dec1_w2"].T, p["dec2_w2"].T], axis=0)   # (2, H, 2F)
    w_fcn = p["fcn_w"].T                               # (2F, F)

    biases = jnp.zeros((8, n), jnp.float32)
    biases = biases.at[0, :H].set(p["enc_b1"])
    biases = biases.at[1, :n].set(p["enc_b2"])
    biases = biases.at[2, :H].set(p["dec1_b1"])
    biases = biases.at[3, :2 * feats].set(p["dec1_b2"])
    biases = biases.at[4, :H].set(p["dec2_b1"])
    biases = biases.at[5, :2 * feats].set(p["dec2_b2"])
    biases = biases.at[6, :feats].set(p["fcn_b"])

    # replication matrix: (x1 @ rep)[b, w*F + j] = x1[b, j]
    rep_mat = jnp.tile(jnp.eye(feats, dtype=jnp.float32), (1, W))   # (F, WF)

    return [w_enc1, w_enc2, w_deca, w_decb, w_fcn, biases, rep_mat]


# --------------------------------- pure-JAX reference (mirrors the PyTorch module) --------------
def reference_forward(src, tgt, p):
    del tgt
    W, B, Fe = src.shape
    hp = jax.lax.Precision.HIGHEST

    def mm(a, b):
        return jnp.dot(a, b, precision=hp)

    def seq(x, w1, b1, w2, b2):
        h = jnp.maximum(mm(x, w1.T) + b1, 0.0)
        return jnp.maximum(mm(h, w2.T) + b2, 0.0)

    def encode(c):
        s = jnp.concatenate([src, c], axis=2)                 # (W, B, 2F)
        s = jnp.transpose(s, (1, 0, 2)).reshape(B, -1)        # (B, n)
        return seq(s, p["enc_w1"], p["enc_b1"], p["enc_w2"], p["enc_b2"])

    def fcn(x):
        return jax.nn.sigmoid(mm(x, p["fcn_w"].T) + p["fcn_b"])

    c = jnp.zeros_like(src)
    x1 = seq(encode(c), p["dec1_w1"], p["dec1_b1"], p["dec1_w2"], p["dec1_b2"])
    x1 = fcn(jnp.transpose(x1.reshape(B, 1, 2 * Fe), (1, 0, 2)))          # (1, B, F)
    c = (x1 - src) ** 2                                                    # (W, B, F)
    x2 = seq(encode(c), p["dec2_w1"], p["dec2_b1"], p["dec2_w2"], p["dec2_b2"])
    x2 = fcn(jnp.transpose(x2.reshape(B, 1, 2 * Fe), (1, 0, 2)))
    return x1, x2


if __name__ == "__main__":
    feats, W, B = 8, N_WINDOW, 128
    key = jax.random.PRNGKey(0)
    k1, k2, k3 = jax.random.split(key, 3)

    src = jax.random.normal(k1, (W, B, feats), dtype=jnp.float32)
    tgt = jax.random.normal(k2, (1, B, feats), dtype=jnp.float32)   # unused by the module's forward
    params = init_params(k3, feats)
    kparams = pack_for_kernel(params, feats)

    # tile_b=64 -> 2 grid steps at B=128 (both TensorCores get work on v7x)
    x1, x2 = tranad_transformer_forward(src, tgt, kparams, tile_b=64)
    x1, x2 = jax.block_until_ready((x1, x2))

    r1, r2 = reference_forward(src, tgt, params)
    assert x1.shape == (1, B, feats), x1.shape
    assert x2.shape == (1, B, feats), x2.shape
    err = max(float(jnp.max(jnp.abs(x1 - r1))), float(jnp.max(jnp.abs(x2 - r2))))
    assert err < 2e-3, err

    print("KERNEL_OK")
</pallas_src>

<mosaic_0001>
module attributes {stable_mosaic.version = 11 : i64} {
  func.func @tranad_kernel(%arg0: i32, %arg1: memref<64x80xf32, #tpu.memory_space<vmem>>, %arg2: memref<2x80x8xf32, #tpu.memory_space<vmem>>, %arg3: memref<8x160xf32, #tpu.memory_space<vmem>>, %arg4: memref<2x160x8xf32, #tpu.memory_space<vmem>>, %arg5: memref<2x8x16xf32, #tpu.memory_space<vmem>>, %arg6: memref<16x8xf32, #tpu.memory_space<vmem>>, %arg7: memref<8x160xf32, #tpu.memory_space<vmem>>, %arg8: memref<8x80xf32, #tpu.memory_space<vmem>>, %arg9: memref<64x8xf32, #tpu.memory_space<vmem>>, %arg10: memref<64x8xf32, #tpu.memory_space<vmem>>) attributes {dimension_semantics = [#tpu.dimension_semantics<parallel>], iteration_bounds = array<i64: 2>, scalar_prefetch = 0 : i64, scratch_operands = 0 : i64, tpu.core_type = #tpu.core_type<tc>, window_params = [{transform_indices = @transform_0, window_bounds = array<i64: 64, 80>}, {pipeline_mode = #tpu.pipeline_mode<synchronous>, transform_indices = @transform_1, window_bounds = array<i64: 2, 80, 8>}, {pipeline_mode = #tpu.pipeline_mode<synchronous>, transform_indices = @transform_2, window_bounds = array<i64: 8, 160>}, {pipeline_mode = #tpu.pipeline_mode<synchronous>, transform_indices = @transform_3, window_bounds = array<i64: 2, 160, 8>}, {pipeline_mode = #tpu.pipeline_mode<synchronous>, transform_indices = @transform_4, window_bounds = array<i64: 2, 8, 16>}, {pipeline_mode = #tpu.pipeline_mode<synchronous>, transform_indices = @transform_5, window_bounds = array<i64: 16, 8>}, {pipeline_mode = #tpu.pipeline_mode<synchronous>, transform_indices = @transform_6, window_bounds = array<i64: 8, 160>}, {pipeline_mode = #tpu.pipeline_mode<synchronous>, transform_indices = @transform_7, window_bounds = array<i64: 8, 80>}, {transform_indices = @transform_8, window_bounds = array<i64: 64, 8>}, {transform_indices = @transform_9, window_bounds = array<i64: 64, 8>}]} {
    %c0 = arith.constant 0 : index
    %c0_0 = arith.constant 0 : index
    %0 = vector.load %arg1[%c0, %c0_0] : memref<64x80xf32, #tpu.memory_space<vmem>>, vector<64x80xf32>
    %c0_1 = arith.constant 0 : index
    %c0_2 = arith.constant 0 : index
    %c0_3 = arith.constant 0 : index
    %1 = vector.load %arg2[%c0_1, %c0_2, %c0_3] : memref<2x80x8xf32, #tpu.memory_space<vmem>>, vector<1x80x8xf32>
    %2 = vector.shape_cast %1 : vector<1x80x8xf32> to vector<80x8xf32>
    %c1 = arith.constant 1 : index
    %c0_4 = arith.constant 0 : index
    %c0_5 = arith.constant 0 : index
    %3 = vector.load %arg2[%c1, %c0_4, %c0_5] : memref<2x80x8xf32, #tpu.memory_space<vmem>>, vector<1x80x8xf32>
    %4 = vector.shape_cast %3 : vector<1x80x8xf32> to vector<80x8xf32>
    %c0_6 = arith.constant 0 : index
    %c0_7 = arith.constant 0 : index
    %5 = vector.load %arg3[%c0_6, %c0_7] : memref<8x160xf32, #tpu.memory_space<vmem>>, vector<8x160xf32>
    %c0_8 = arith.constant 0 : index
    %c0_9 = arith.constant 0 : index
    %6 = vector.load %arg6[%c0_8, %c0_9] : memref<16x8xf32, #tpu.memory_space<vmem>>, vector<16x8xf32>
    %c0_10 = arith.constant 0 : index
    %c0_11 = arith.constant 0 : index
    %7 = vector.load %arg8[%c0_10, %c0_11] : memref<8x80xf32, #tpu.memory_space<vmem>>, vector<8x80xf32>
    %c0_12 = arith.constant 0 : index
    %c0_13 = arith.constant 0 : index
    %8 = vector.load %arg7[%c0_12, %c0_13] : memref<8x160xf32, #tpu.memory_space<vmem>>, vector<1x8xf32>
    %c1_14 = arith.constant 1 : index
    %c0_15 = arith.constant 0 : index
    %9 = vector.load %arg7[%c1_14, %c0_15] : memref<8x160xf32, #tpu.memory_space<vmem>>, vector<1x160xf32>
    %c2 = arith.constant 2 : index
    %c0_16 = arith.constant 0 : index
    %10 = vector.load %arg7[%c2, %c0_16] : memref<8x160xf32, #tpu.memory_space<vmem>>, vector<1x8xf32>
    %c3 = arith.constant 3 : index
    %c0_17 = arith.constant 0 : index
    %11 = vector.load %arg7[%c3, %c0_17] : memref<8x160xf32, #tpu.memory_space<vmem>>, vector<1x16xf32>
    %c4 = arith.constant 4 : index
    %c0_18 = arith.constant 0 : index
    %12 = vector.load %arg7[%c4, %c0_18] : memref<8x160xf32, #tpu.memory_space<vmem>>, vector<1x8xf32>
    %c5 = arith.constant 5 : index
    %c0_19 = arith.constant 0 : index
    %13 = vector.load %arg7[%c5, %c0_19] : memref<8x160xf32, #tpu.memory_space<vmem>>, vector<1x16xf32>
    %c6 = arith.constant 6 : index
    %c0_20 = arith.constant 0 : index
    %14 = vector.load %arg7[%c6, %c0_20] : memref<8x160xf32, #tpu.memory_space<vmem>>, vector<1x8xf32>
    %cst = arith.constant dense<0.000000e+00> : vector<64x8xf32>
    %15 = tpu.matmul %0, %2, %cst {dimension_numbers = #tpu.dot_dimension_numbers<[1], [0], [0], [1], [0, 0, 1, 1], [], []>} : vector<64x80xf32>, vector<80x8xf32>, vector<64x8xf32> -> vector<64x8xf32>
    %16 = vector.broadcast %8 : vector<1x8xf32> to vector<64x8xf32>
    %17 = arith.addf %15, %16 : vector<64x8xf32>
    %cst_21 = arith.constant 0.000000e+00 : f32
    %18 = vector.broadcast %cst_21 : f32 to vector<64x8xf32>
    %19 = arith.maximumf %17, %18 : vector<64x8xf32>
    %c0_22 = arith.constant 0 : index
    %c0_23 = arith.constant 0 : index
    %c0_24 = arith.constant 0 : index
    %20 = vector.load %arg4[%c0_22, %c0_23, %c0_24] : memref<2x160x8xf32, #tpu.memory_space<vmem>>, vector<1x160x8xf32>
    %21 = vector.shape_cast %20 : vector<1x160x8xf32> to vector<160x8xf32>
    %c0_25 = arith.constant 0 : index
    %c0_26 = arith.constant 0 : index
    %c0_27 = arith.constant 0 : index
    %22 = vector.load %arg5[%c0_25, %c0_26, %c0_27] : memref<2x8x16xf32, #tpu.memory_space<vmem>>, vector<1x8x16xf32>
    %23 = vector.shape_cast %22 : vector<1x8x16xf32> to vector<8x16xf32>
    %cst_28 = arith.constant dense<0.000000e+00> : vector<64x160xf32>
    %24 = tpu.matmul %19, %5, %cst_28 {dimension_numbers = #tpu.dot_dimension_numbers<[1], [0], [0], [1], [0, 0, 1, 1], [], []>} : vector<64x8xf32>, vector<8x160xf32>, vector<64x160xf32> -> vector<64x160xf32>
    %25 = vector.broadcast %9 : vector<1x160xf32> to vector<64x160xf32>
    %26 = arith.addf %24, %25 : vector<64x160xf32>
    %cst_29 = arith.constant 0.000000e+00 : f32
    %27 = vector.broadcast %cst_29 : f32 to vector<64x160xf32>
    %28 = arith.maximumf %26, %27 : vector<64x160xf32>
    %cst_30 = arith.constant dense<0.000000e+00> : vector<64x8xf32>
    %29 = tpu.matmul %28, %21, %cst_30 {dimension_numbers = #tpu.dot_dimension_numbers<[1], [0], [0], [1], [0, 0, 1, 1], [], []>} : vector<64x160xf32>, vector<160x8xf32>, vector<64x8xf32> -> vector<64x8xf32>
    %30 = vector.broadcast %10 : vector<1x8xf32> to vector<64x8xf32>
    %31 = arith.addf %29, %30 : vector<64x8xf32>
    %cst_31 = arith.constant 0.000000e+00 : f32
    %32 = vector.broadcast %cst_31 : f32 to vector<64x8xf32>
    %33 = arith.maximumf %31, %32 : vector<64x8xf32>
    %cst_32 = arith.constant dense<0.000000e+00> : vector<64x16xf32>
    %34 = tpu.matmul %33, %23, %cst_32 {dimension_numbers = #tpu.dot_dimension_numbers<[1], [0], [0], [1], [0, 0, 1, 1], [], []>} : vector<64x8xf32>, vector<8x16xf32>, vector<64x16xf32> -> vector<64x16xf32>
    %35 = vector.broadcast %11 : vector<1x16xf32> to vector<64x16xf32>
    %36 = arith.addf %34, %35 : vector<64x16xf32>
    %cst_33 = arith.constant 0.000000e+00 : f32
    %37 = vector.broadcast %cst_33 : f32 to vector<64x16xf32>
    %38 = arith.maximumf %36, %37 : vector<64x16xf32>
    %cst_34 = arith.constant dense<0.000000e+00> : vector<64x8xf32>
    %39 = tpu.matmul %38, %6, %cst_34 {dimension_numbers = #tpu.dot_dimension_numbers<[1], [0], [0], [1], [0, 0, 1, 1], [], []>} : vector<64x16xf32>, vector<16x8xf32>, vector<64x8xf32> -> vector<64x8xf32>
    %40 = vector.broadcast %14 : vector<1x8xf32> to vector<64x8xf32>
    %41 = arith.addf %39, %40 : vector<64x8xf32>
    %42 = arith.negf %41 : vector<64x8xf32>
    %43 = math.exp %42 : vector<64x8xf32>
    %cst_35 = arith.constant 1.000000e+00 : f32
    %44 = vector.broadcast %cst_35 : f32 to vector<64x8xf32>
    %45 = arith.addf %44, %43 : vector<64x8xf32>
    %46 = arith.divf %44, %45 : vector<64x8xf32>
    %cst_36 = arith.constant dense<0.000000e+00> : vector<64x80xf32>
    %47 = tpu.matmul %46, %7, %cst_36 {dimension_numbers = #tpu.dot_dimension_numbers<[1], [0], [0], [1], [0, 0, 1, 1], [], []>} : vector<64x8xf32>, vector<8x80xf32>, vector<64x80xf32> -> vector<64x80xf32>
    %48 = arith.subf %47, %0 : vector<64x80xf32>
    %49 = arith.mulf %48, %48 : vector<64x80xf32>
    %cst_37 = arith.constant dense<0.000000e+00> : vector<64x8xf32>
    %50 = tpu.matmul %0, %2, %cst_37 {dimension_numbers = #tpu.dot_dimension_numbers<[1], [0], [0], [1], [0, 0, 1, 1], [], []>} : vector<64x80xf32>, vector<80x8xf32>, vector<64x8xf32> -> vector<64x8xf32>
    %cst_38 = arith.constant dense<0.000000e+00> : vector<64x8xf32>
    %51 = tpu.matmul %49, %4, %cst_38 {dimension_numbers = #tpu.dot_dimension_numbers<[1], [0], [0], [1], [0, 0, 1, 1], [], []>} : vector<64x80xf32>, vector<80x8xf32>, vector<64x8xf32> -> vector<64x8xf32>
    %52 = arith.addf %50, %51 : vector<64x8xf32>
    %53 = vector.broadcast %8 : vector<1x8xf32> to vector<64x8xf32>
    %54 = arith.addf %52, %53 : vector<64x8xf32>
    %cst_39 = arith.constant 0.000000e+00 : f32
    %55 = vector.broadcast %cst_39 : f32 to vector<64x8xf32>
    %56 = arith.maximumf %54, %55 : vector<64x8xf32>
    %c1_40 = arith.constant 1 : index
    %c0_41 = arith.constant 0 : index
    %c0_42 = arith.constant 0 : index
    %57 = vector.load %arg4[%c1_40, %c0_41, %c0_42] : memref<2x160x8xf32, #tpu.memory_space<vmem>>, vector<1x160x8xf32>
    %58 = vector.shape_cast %57 : vector<1x160x8xf32> to vector<160x8xf32>
    %c1_43 = arith.constant 1 : index
    %c0_44 = arith.constant 0 : index
    %c0_45 = arith.constant 0 : index
    %59 = vector.load %arg5[%c1_43, %c0_44, %c0_45] : memref<2x8x16xf32, #tpu.memory_space<vmem>>, vector<1x8x16xf32>
    %60 = vector.shape_cast %59 : vector<1x8x16xf32> to vector<8x16xf32>
    %cst_46 = arith.constant dense<0.000000e+00> : vector<64x160xf32>
    %61 = tpu.matmul %56, %5, %cst_46 {dimension_numbers = #tpu.dot_dimension_numbers<[1], [0], [0], [1], [0, 0, 1, 1], [], []>} : vector<64x8xf32>, vector<8x160xf32>, vector<64x160xf32> -> vector<64x160xf32>
    %62 = vector.broadcast %9 : vector<1x160xf32> to vector<64x160xf32>
    %63 = arith.addf %61, %62 : vector<64x160xf32>
    %cst_47 = arith.constant 0.000000e+00 : f32
    %64 = vector.broadcast %cst_47 : f32 to vector<64x160xf32>
    %65 = arith.maximumf %63, %64 : vector<64x160xf32>
    %cst_48 = arith.constant dense<0.000000e+00> : vector<64x8xf32>
    %66 = tpu.matmul %65, %58, %cst_48 {dimension_numbers = #tpu.dot_dimension_numbers<[1], [0], [0], [1], [0, 0, 1, 1], [], []>} : vector<64x160xf32>, vector<160x8xf32>, vector<64x8xf32> -> vector<64x8xf32>
    %67 = vector.broadcast %12 : vector<1x8xf32> to vector<64x8xf32>
    %68 = arith.addf %66, %67 : vector<64x8xf32>
    %cst_49 = arith.constant 0.000000e+00 : f32
    %69 = vector.broadcast %cst_49 : f32 to vector<64x8xf32>
    %70 = arith.maximumf %68, %69 : vector<64x8xf32>
    %cst_50 = arith.constant dense<0.000000e+00> : vector<64x16xf32>
    %71 = tpu.matmul %70, %60, %cst_50 {dimension_numbers = #tpu.dot_dimension_numbers<[1], [0], [0], [1], [0, 0, 1, 1], [], []>} : vector<64x8xf32>, vector<8x16xf32>, vector<64x16xf32> -> vector<64x16xf32>
    %72 = vector.broadcast %13 : vector<1x16xf32> to vector<64x16xf32>
    %73 = arith.addf %71, %72 : vector<64x16xf32>
    %cst_51 = arith.constant 0.000000e+00 : f32
    %74 = vector.broadcast %cst_51 : f32 to vector<64x16xf32>
    %75 = arith.maximumf %73, %74 : vector<64x16xf32>
    %cst_52 = arith.constant dense<0.000000e+00> : vector<64x8xf32>
    %76 = tpu.matmul %75, %6, %cst_52 {dimension_numbers = #tpu.dot_dimension_numbers<[1], [0], [0], [1], [0, 0, 1, 1], [], []>} : vector<64x16xf32>, vector<16x8xf32>, vector<64x8xf32> -> vector<64x8xf32>
    %77 = vector.broadcast %14 : vector<1x8xf32> to vector<64x8xf32>
    %78 = arith.addf %76, %77 : vector<64x8xf32>
    %79 = arith.negf %78 : vector<64x8xf32>
    %80 = math.exp %79 : vector<64x8xf32>
    %cst_53 = arith.constant 1.000000e+00 : f32
    %81 = vector.broadcast %cst_53 : f32 to vector<64x8xf32>
    %82 = arith.addf %81, %80 : vector<64x8xf32>
    %83 = arith.divf %81, %82 : vector<64x8xf32>
    %c0_54 = arith.constant 0 : index
    %c0_55 = arith.constant 0 : index
    %84 = vector.load %arg9[%c0_54, %c0_55] : memref<64x8xf32, #tpu.memory_space<vmem>>, vector<64x8xf32>
    tpu.vector_store %arg9[%c0_54, %c0_55], %46 {strides = array<i32>} : memref<64x8xf32, #tpu.memory_space<vmem>>, vector<64x8xf32>,
    %c0_56 = arith.constant 0 : index
    %c0_57 = arith.constant 0 : index
    %85 = vector.load %arg10[%c0_56, %c0_57] : memref<64x8xf32, #tpu.memory_space<vmem>>, vector<64x8xf32>
    tpu.vector_store %arg10[%c0_56, %c0_57], %83 {strides = array<i32>} : memref<64x8xf32, #tpu.memory_space<vmem>>, vector<64x8xf32>,
    return
  }
  func.func @transform_0(%arg0: i32) -> (i32, i32) {
    %c0_i32 = arith.constant 0 : i32
    %c0_i32_0 = arith.constant 0 : i32
    return %arg0, %c0_i32 : i32, i32
  }
  func.func @transform_1(%arg0: i32) -> (i32, i32, i32) {
    %c0_i32 = arith.constant 0 : i32
    %c0_i32_0 = arith.constant 0 : i32
    %c0_i32_1 = arith.constant 0 : i32
    %c0_i32_2 = arith.constant 0 : i32
    return %c0_i32, %c0_i32_0, %c0_i32_1 : i32, i32, i32
  }
  func.func @transform_2(%arg0: i32) -> (i32, i32) {
    %c0_i32 = arith.constant 0 : i32
    %c0_i32_0 = arith.constant 0 : i32
    %c0_i32_1 = arith.constant 0 : i32
    return %c0_i32, %c0_i32_0 : i32, i32
  }
  func.func @transform_3(%arg0: i32) -> (i32, i32, i32) {
    %c0_i32 = arith.constant 0 : i32
    %c0_i32_0 = arith.constant 0 : i32
    %c0_i32_1 = arith.constant 0 : i32
    %c0_i32_2 = arith.constant 0 : i32
    return %c0_i32, %c0_i32_0, %c0_i32_1 : i32, i32, i32
  }
  func.func @transform_4(%arg0: i32) -> (i32, i32, i32) {
    %c0_i32 = arith.constant 0 : i32
    %c0_i32_0 = arith.constant 0 : i32
    %c0_i32_1 = arith.constant 0 : i32
    %c0_i32_2 = arith.constant 0 : i32
    return %c0_i32, %c0_i32_0, %c0_i32_1 : i32, i32, i32
  }
  func.func @transform_5(%arg0: i32) -> (i32, i32) {
    %c0_i32 = arith.constant 0 : i32
    %c0_i32_0 = arith.constant 0 : i32
    %c0_i32_1 = arith.constant 0 : i32
    return %c0_i32, %c0_i32_0 : i32, i32
  }
  func.func @transform_6(%arg0: i32) -> (i32, i32) {
    %c0_i32 = arith.constant 0 : i32
    %c0_i32_0 = arith.constant 0 : i32
    %c0_i32_1 = arith.constant 0 : i32
    return %c0_i32, %c0_i32_0 : i32, i32
  }
  func.func @transform_7(%arg0: i32) -> (i32, i32) {
    %c0_i32 = arith.constant 0 : i32
    %c0_i32_0 = arith.constant 0 : i32
    %c0_i32_1 = arith.constant 0 : i32
    return %c0_i32, %c0_i32_0 : i32, i32
  }
  func.func @transform_8(%arg0: i32) -> (i32, i32) {
    %c0_i32 = arith.constant 0 : i32
    %c0_i32_0 = arith.constant 0 : i32
    return %arg0, %c0_i32 : i32, i32
  }
  func.func @transform_9(%arg0: i32) -> (i32, i32) {
    %c0_i32 = arith.constant 0 : i32
    %c0_i32_0 = arith.constant 0 : i32
    return %arg0, %c0_i32 : i32, i32
  }
}

</mosaic_0001>

<llo_original>
// kernel: tpu_custom_call.1
$region0: #{tpu_custom_call.1}
  #allocation0 [shape = 'u32[]', space=smem, size = 0x4, offset = 0x4, fixed_abs, tag = 'smem constant byte address 0x4 - core index']
  #allocation1 [shape = 'u32[144,128]{1,0:T(1,128)}', space=vmem, size = 0x12000, scoped, tag = 'internal scratch']
  %s0 = inlined_call_operand.vmem [shape: f32[128,80], index: 0, kind: input, shape index: {}]
  %s1 = inlined_call_operand.vmem [shape: f32[2,80,8], index: 1, kind: input, shape index: {}]
  %s2 = inlined_call_operand.vmem [shape: f32[8,160], index: 2, kind: input, shape index: {}]
  %s3 = inlined_call_operand.vmem [shape: f32[2,160,8], index: 3, kind: input, shape index: {}]
  %s4 = inlined_call_operand.vmem [shape: f32[2,8,16], index: 4, kind: input, shape index: {}]
  %s5 = inlined_call_operand.vmem [shape: f32[16,8], index: 5, kind: input, shape index: {}]
  %s6 = inlined_call_operand.vmem [shape: f32[8,160], index: 6, kind: input, shape index: {}]
  %s7 = inlined_call_operand.vmem [shape: f32[8,80], index: 7, kind: input, shape index: {}]
  %s8 = inlined_call_operand.vmem [shape: f32[128,8], index: 8, kind: output, shape index: {0}]
  %s9 = inlined_call_operand.vmem [shape: f32[128,8], index: 9, kind: output, shape index: {1}]
  %10 = xla_tuple %s8, %s9
  %s11 = sld [smem:[#allocation0]]
  $region73: #{tpu_custom_call.1} parent=0
    _
  %s13 = ssub.s32 1, %s11
  %s14 = scalar_select 0, %s13, %s11
  loop: start=0, step=1, limit=4
  $region2: #{tpu_custom_call.1} parent=0 // loop_pre_header
    _
  $region3: #{tpu_custom_call.1} parent=0 // loop_header
    %s16 = sphi 0, %s20
    %p17 = scmp.ge.s32.totalorder %s16, 4
    %s26 = sphi 0, %s28
    %s29 = sphi 0, %s26
    %s30 = sphi 0, %s29
    %s46 = sphi 0, %s30
    %s50 = sphi 0, %s50
    %s52 = sphi 0, %s50
    %s53 = sphi 0, %s52
    %s67 = sphi 0, %s53
    %s71 = sphi 0, %s71
    %s73 = sphi 0, %s71
    %s74 = sphi 0, %s73
    %s88 = sphi 0, %s74
    %s92 = sphi 0, %s92
    %s94 = sphi 0, %s92
    %s95 = sphi 0, %s94
    %s109 = sphi 0, %s95
    %s113 = sphi 0, %s113
    %s115 = sphi 0, %s113
    %s116 = sphi 0, %s115
    %s130 = sphi 0, %s116
    %s134 = sphi 0, %s134
    %s136 = sphi 0, %s134
    %s137 = sphi 0, %s136
    %s151 = sphi 0, %s137
    %s155 = sphi 0, %s155
    %s157 = sphi 0, %s155
    %s158 = sphi 0, %s157
    %s172 = sphi 0, %s158
    %s176 = sphi 0, %s176
    %s178 = sphi 0, %s176
    %s179 = sphi 0, %s178
    %s193 = sphi 0, %s179
    %s199 = sphi 0, %s201
    %s202 = sphi 0, %s199
    %s203 = sphi 0, %s202
    %s219 = sphi 0, %s203
    %s225 = sphi 0, %s227
    %s228 = sphi 0, %s225
    %s229 = sphi 0, %s228
    %s245 = sphi 0, %s229
  $region4: #{tpu_custom_call.1} parent=0 // loop_header_branch
    %19 = sbr.rel (%p17) target = $region8
  $region5: #{tpu_custom_call.1} parent=0 // loop_body
    %s21 = ssub.s32 %s16, 1
    %s22 = ssub.s32 %s16, 2
    %s23 = sadd.s32 %s16, 1
    %s24 = ssub.s32 %s16, %s23
    %p25 = scmp.eq.s32.totalorder %s24, 0
    %s27 = sadd.s32 %s26, 1
    %s28 = scalar_select %p25, %s26, %s27
    %p31 = pneg %p25
    %p32 = scmp.eq.s32.totalorder %s16, 1
    %p33 = por %p31, %p32
    %p34 = scmp.ne.s32.totalorder %s26, %s29
    %p35 = scmp.eq.s32.totalorder %s16, 0
    %p36 = por %p34, %p35
    %p37 = scmp.ne.s32.totalorder %s26, %s29
    %p38 = scmp.eq.s32.totalorder %s21, 1
    %p39 = por %p37, %p38
    %p40 = scmp.ne.s32.totalorder %s29, %s30
    %p41 = scmp.eq.s32.totalorder %s21, 0
    %p42 = por %p40, %p41
    %p43 = scmp.ne.s32.totalorder %s29, %s30
    %p44 = scmp.eq.s32.totalorder %s22, 1
    %p45 = por %p43, %p44
    %p47 = scmp.ne.s32.totalorder %s30, %s46
    %p48 = scmp.eq.s32.totalorder %s22, 0
    %p49 = por %p47, %p48
    %s51 = sadd.s32 %s50, 1
    %p54 = scmp.eq.s32.totalorder %s16, 1
    %p55 = scmp.ne.s32.totalorder %s50, %s52
    %p56 = scmp.eq.s32.totalorder %s16, 0
    %p57 = por %p55, %p56
    %p58 = scmp.ne.s32.totalorder %s50, %s52
    %p59 = scmp.eq.s32.totalorder %s21, 1
    %p60 = por %p58, %p59
    %p61 = scmp.ne.s32.totalorder %s52, %s53
    %p62 = scmp.eq.s32.totalorder %s21, 0
    %p63 = por %p61, %p62
    %p64 = scmp.ne.s32.totalorder %s52, %s53
    %p65 = scmp.eq.s32.totalorder %s22, 1
    %p66 = por %p64, %p65
    %p68 = scmp.ne.s32.totalorder %s53, %s67
    %p69 = scmp.eq.s32.totalorder %s22, 0
    %p70 = por %p68, %p69
    %s72 = sadd.s32 %s71, 1
    %p75 = scmp.eq.s32.totalorder %s16, 1
    %p76 = scmp.ne.s32.totalorder %s71, %s73
    %p77 = scmp.eq.s32.totalorder %s16, 0
    %p78 = por %p76, %p77
    %p79 = scmp.ne.s32.totalorder %s71, %s73
    %p80 = scmp.eq.s32.totalorder %s21, 1
    %p81 = por %p79, %p80
    %p82 = scmp.ne.s32.totalorder %s73, %s74
    %p83 = scmp.eq.s32.totalorder %s21, 0
    %p84 = por %p82, %p83
    %p85 = scmp.ne.s32.totalorder %s73, %s74
    %p86 = scmp.eq.s32.totalorder %s22, 1
    %p87 = por %p85, %p86
    %p89 = scmp.ne.s32.totalorder %s74, %s88
    %p90 = scmp.eq.s32.totalorder %s22, 0
    %p91 = por %p89, %p90
    %s93 = sadd.s32 %s92, 1
    %p96 = scmp.eq.s32.totalorder %s16, 1
    %p97 = scmp.ne.s32.totalorder %s92, %s94
    %p98 = scmp.eq.s32.totalorder %s16, 0
    %p99 = por %p97, %p98
    %p100 = scmp.ne.s32.totalorder %s92, %s94
    %p101 = scmp.eq.s32.totalorder %s21, 1
    %p102 = por %p100, %p101
    %p103 = scmp.ne.s32.totalorder %s94, %s95
    %p104 = scmp.eq.s32.totalorder %s21, 0
    %p105 = por %p103, %p104
    %p106 = scmp.ne.s32.totalorder %s94, %s95
    %p107 = scmp.eq.s32.totalorder %s22, 1
    %p108 = por %p106, %p107
    %p110 = scmp.ne.s32.totalorder %s95, %s109
    %p111 = scmp.eq.s32.totalorder %s22, 0
    %p112 = por %p110, %p111
    %s114 = sadd.s32 %s113, 1
    %p117 = scmp.eq.s32.totalorder %s16, 1
    %p118 = scmp.ne.s32.totalorder %s113, %s115
    %p119 = scmp.eq.s32.totalorder %s16, 0
    %p120 = por %p118, %p119
    %p121 = scmp.ne.s32.totalorder %s113, %s115
    %p122 = scmp.eq.s32.totalorder %s21, 1
    %p123 = por %p121, %p122
    %p124 = scmp.ne.s32.totalorder %s115, %s116
    %p125 = scmp.eq.s32.totalorder %s21, 0
    %p126 = por %p124, %p125
    %p127 = scmp.ne.s32.totalorder %s115, %s116
    %p128 = scmp.eq.s32.totalorder %s22, 1
    %p129 = por %p127, %p128
    %p131 = scmp.ne.s32.totalorder %s116, %s130
    %p132 = scmp.eq.s32.totalorder %s22, 0
    %p133 = por %p131, %p132
    %s135 = sadd.s32 %s134, 1
    %p138 = scmp.eq.s32.totalorder %s16, 1
    %p139 = scmp.ne.s32.totalorder %s134, %s136
    %p140 = scmp.eq.s32.totalorder %s16, 0
    %p141 = por %p139, %p140
    %p142 = scmp.ne.s32.totalorder %s134, %s136
    %p143 = scmp.eq.s32.totalorder %s21, 1
    %p144 = por %p142, %p143
    %p145 = scmp.ne.s32.totalorder %s136, %s137
    %p146 = scmp.eq.s32.totalorder %s21, 0
    %p147 = por %p145, %p146
    %p148 = scmp.ne.s32.totalorder %s136, %s137
    %p149 = scmp.eq.s32.totalorder %s22, 1
    %p150 = por %p148, %p149
    %p152 = scmp.ne.s32.totalorder %s137, %s151
    %p153 = scmp.eq.s32.totalorder %s22, 0
    %p154 = por %p152, %p153
    %s156 = sadd.s32 %s155, 1
    %p159 = scmp.eq.s32.totalorder %s16, 1
    %p160 = scmp.ne.s32.totalorder %s155, %s157
    %p161 = scmp.eq.s32.totalorder %s16, 0
    %p162 = por %p160, %p161
    %p163 = scmp.ne.s32.totalorder %s155, %s157
    %p164 = scmp.eq.s32.totalorder %s21, 1
    %p165 = por %p163, %p164
    %p166 = scmp.ne.s32.totalorder %s157, %s158
    %p167 = scmp.eq.s32.totalorder %s21, 0
    %p168 = por %p166, %p167
    %p169 = scmp.ne.s32.totalorder %s157, %s158
    %p170 = scmp.eq.s32.totalorder %s22, 1
    %p171 = por %p169, %p170
    %p173 = scmp.ne.s32.totalorder %s158, %s172
    %p174 = scmp.eq.s32.totalorder %s22, 0
    %p175 = por %p173, %p174
    %s177 = sadd.s32 %s176, 1
    %p180 = scmp.eq.s32.totalorder %s16, 1
    %p181 = scmp.ne.s32.totalorder %s176, %s178
    %p182 = scmp.eq.s32.totalorder %s16, 0
    %p183 = por %p181, %p182
    %p184 = scmp.ne.s32.totalorder %s176, %s178
    %p185 = scmp.eq.s32.totalorder %s21, 1
    %p186 = por %p184, %p185
    %p187 = scmp.ne.s32.totalorder %s178, %s179
    %p188 = scmp.eq.s32.totalorder %s21, 0
    %p189 = por %p187, %p188
    %p190 = scmp.ne.s32.totalorder %s178, %s179
    %p191 = scmp.eq.s32.totalorder %s22, 1
    %p192 = por %p190, %p191
    %p194 = scmp.ne.s32.totalorder %s179, %s193
    %p195 = scmp.eq.s32.totalorder %s22, 0
    %p196 = por %p194, %p195
    %s197 = ssub.s32 %s16, %s23
    %p198 = scmp.eq.s32.totalorder %s197, 0
    %s200 = sadd.s32 %s199, 1
    %s201 = scalar_select %p198, %s199, %s200
    %p204 = pneg %p198
    %p205 = scmp.eq.s32.totalorder %s16, 1
    %p206 = por %p204, %p205
    %p207 = scmp.ne.s32.totalorder %s199, %s202
    %p208 = scmp.eq.s32.totalorder %s16, 0
    %p209 = por %p207, %p208
    %p210 = scmp.ne.s32.totalorder %s199, %s202
    %p211 = scmp.eq.s32.totalorder %s21, 1
    %p212 = por %p210, %p211
    %p213 = scmp.ne.s32.totalorder %s202, %s203
    %p214 = scmp.eq.s32.totalorder %s21, 0
    %p215 = por %p213, %p214
    %p216 = scmp.ne.s32.totalorder %s202, %s203
    %p217 = scmp.eq.s32.totalorder %s22, 1
    %p218 = por %p216, %p217
    %p220 = scmp.ne.s32.totalorder %s203, %s219
    %p221 = scmp.eq.s32.totalorder %s22, 0
    %p222 = por %p220, %p221
    %s223 = ssub.s32 %s16, %s23
    %p224 = scmp.eq.s32.totalorder %s223, 0
    %s226 = sadd.s32 %s225, 1
    %s227 = scalar_select %p224, %s225, %s226
    %p230 = pneg %p224
    %p231 = scmp.eq.s32.totalorder %s16, 1
    %p232 = por %p230, %p231
    %p233 = scmp.ne.s32.totalorder %s225, %s228
    %p234 = scmp.eq.s32.totalorder %s16, 0
    %p235 = por %p233, %p234
    %p236 = scmp.ne.s32.totalorder %s225, %s228
    %p237 = scmp.eq.s32.totalorder %s21, 1
    %p238 = por %p236, %p237
    %p239 = scmp.ne.s32.totalorder %s228, %s229
    %p240 = scmp.eq.s32.totalorder %s21, 0
    %p241 = por %p239, %p240
    %p242 = scmp.ne.s32.totalorder %s228, %s229
    %p243 = scmp.eq.s32.totalorder %s22, 1
    %p244 = por %p242, %p243
    %p246 = scmp.ne.s32.totalorder %s229, %s245
    %p247 = scmp.eq.s32.totalorder %s22, 0
    %p248 = por %p246, %p247
    %p249 = scmp.le.s32.totalorder 1, %s16
    %p250 = scmp.lt.s32.totalorder %s16, 3
    %p251 = pnand %p249, %p250
    %p252 = pneg %p251
    // Predicated region
    $region9: #{tpu_custom_call.1} parent=5 // pred_check
      _
    $region10: #{tpu_custom_call.1} parent=5 // pred_check_branch
      %254 = sbr.rel (%p251) target = $region12
    $region11: #{tpu_custom_call.1} parent=5 // pred_region
      %s255 = ssub.s32 %s16, 1
      // Predicated region
      $region13: #{tpu_custom_call.1} parent=11 // pred_check
        %p256 = pneg %p63
      $region14: #{tpu_custom_call.1} parent=11 // pred_check_branch
        %258 = sbr.rel (%p256) target = $region16
      $region15: #{tpu_custom_call.1} parent=11 // pred_region
        _
      $region16: #{tpu_custom_call.1} parent=11 // pred_fallthru
        _
      // Predicated region
      $region17: #{tpu_custom_call.1} parent=11 // pred_check
        %p259 = pneg %p84
      $region18: #{tpu_custom_call.1} parent=11 // pred_check_branch
        %261 = sbr.rel (%p259) target = $region20
      $region19: #{tpu_custom_call.1} parent=11 // pred_region
        _
      $region20: #{tpu_custom_call.1} parent=11 // pred_fallthru
        _
      // Predicated region
      $region21: #{tpu_custom_call.1} parent=11 // pred_check
        %p262 = pneg %p105
      $region22: #{tpu_custom_call.1} parent=11 // pred_check_branch
        %264 = sbr.rel (%p262) target = $region24
      $region23: #{tpu_custom_call.1} parent=11 // pred_region
        _
      $region24: #{tpu_custom_call.1} parent=11 // pred_fallthru
        _
      // Predicated region
      $region25: #{tpu_custom_call.1} parent=11 // pred_check
        %p265 = pneg %p126
      $region26: #{tpu_custom_call.1} parent=11 // pred_check_branch
        %267 = sbr.rel (%p265) target = $region28
      $region27: #{tpu_custom_call.1} parent=11 // pred_region
        _
      $region28: #{tpu_custom_call.1} parent=11 // pred_fallthru
        _
      // Predicated region
      $region29: #{tpu_custom_call.1} parent=11 // pred_check
        %p268 = pneg %p147
      $region30: #{tpu_custom_call.1} parent=11 // pred_check_branch
        %270 = sbr.rel (%p268) target = $region32
      $region31: #{tpu_custom_call.1} parent=11 // pred_region
        _
      $region32: #{tpu_custom_call.1} parent=11 // pred_fallthru
        _
      // Predicated region
      $region33: #{tpu_custom_call.1} parent=11 // pred_check
        %p271 = pneg %p168
      $region34: #{tpu_custom_call.1} parent=11 // pred_check_branch
        %273 = sbr.rel (%p271) target = $region36
      $region35: #{tpu_custom_call.1} parent=11 // pred_region
        _
      $region36: #{tpu_custom_call.1} parent=11 // pred_fallthru
        _
      // Predicated region
      $region37: #{tpu_custom_call.1} parent=11 // pred_check
        %p274 = pneg %p189
      $region38: #{tpu_custom_call.1} parent=11 // pred_check_branch
        %276 = sbr.rel (%p274) target = $region40
      $region39: #{tpu_custom_call.1} parent=11 // pred_region
        _
      $region40: #{tpu_custom_call.1} parent=11 // pred_fallthru
        _
    $region12: #{tpu_custom_call.1} parent=5 // pred_fallthru
      _
    %p277 = scmp.lt.s32.totalorder %s16, 2
    // Predicated region
    $region41: #{tpu_custom_call.1} parent=5 // pred_check
      %p278 = pneg %p277
    $region42: #{tpu_custom_call.1} parent=5 // pred_check_branch
      %280 = sbr.rel (%p278) target = $region44
    $region43: #{tpu_custom_call.1} parent=5 // pred_region
      // Predicated region
      $region45: #{tpu_custom_call.1} parent=43 // pred_check
        %p281 = pneg %p36
      $region46: #{tpu_custom_call.1} parent=43 // pred_check_branch
        %283 = sbr.rel (%p281) target = $region48
      $region47: #{tpu_custom_call.1} parent=43 // pred_region
        %s284 = smul.u32 8, %s16
        %p285 = scmp.lt.s32.totalorder %s284, 15
        %s286 = scalar_select %p285, %s284, 15
        %s287 = smul.addr %s286, 8
        %s288 = scalar_lea.vmem %s0, %s287
        %s289 = smul.u32 8, %s16
      $region48: #{tpu_custom_call.1} parent=43 // pred_fallthru
        _
    $region44: #{tpu_custom_call.1} parent=5 // pred_fallthru
      _
    %p290 = scmp.le.s32.totalorder 1, %s16
    %p291 = scmp.lt.s32.totalorder %s16, 3
    %p292 = pnand %p290, %p291
    %p293 = pneg %p292
    // Predicated region
    $region49: #{tpu_custom_call.1} parent=5 // pred_check
      _
    $region50: #{tpu_custom_call.1} parent=5 // pred_check_branch
      %295 = sbr.rel (%p292) target = $region52
    $region51: #{tpu_custom_call.1} parent=5 // pred_region
      %s296 = ssub.s32 %s16, 1
      %s297 = smul.u32 8, %s21
      %p298 = scmp.lt.s32.totalorder %s297, 15
      %s299 = scalar_select %p298, %s297, 15
      %s300 = smul.addr %s299, 8
      %s301 = scalar_lea.vmem %s0, %s300
      %p302 = pneg %p42
      %p303 = pneg %p39
      %p304 = pneg %p63
      %p305 = pneg %p60
      %p306 = pneg %p84
      %p307 = pneg %p81
      %p308 = pneg %p105
      %p309 = pneg %p102
      %p310 = pneg %p126
      %p311 = pneg %p123
      %p312 = pneg %p147
      %p313 = pneg %p144
      %p314 = pneg %p168
      %p315 = pneg %p165
      %p316 = pneg %p189
      %p317 = pneg %p186
      %p318 = pneg %p215
      %p319 = pneg %p212
      %s320 = smul.u32 8, %s21
      %p321 = scmp.lt.s32.totalorder %s320, 15
      %s322 = scalar_select %p321, %s320, 15
      %s323 = smul.addr %s322, 8
      %s324 = scalar_lea.vmem %s8, %s323
      %p325 = pneg %p241
      %p326 = pneg %p238
      %s327 = smul.u32 8, %s21
      %p328 = scmp.lt.s32.totalorder %s327, 15
      %s329 = scalar_select %p328, %s327, 15
      %s330 = smul.addr %s329, 8
      %s331 = scalar_lea.vmem %s9, %s330
      %s332 = smul.u32 8, %s21
      %p333 = scmp.lt.s32.totalorder %s332, 15
      %s334 = scalar_select %p333, %s332, 15
      %s335 = smul.addr %s334, 8
      %s336 = scalar_lea.vmem %s0, %s335
      %s337 = smul.u32 8, %s21
      %s338 = smul.u32 8, %s21
      %p339 = scmp.lt.s32.totalorder %s338, 15
      %s340 = scalar_select %p339, %s338, 15
      %s341 = smul.addr %s340, 8
      %s342 = scalar_lea.vmem %s8, %s341
      %s343 = smul.u32 8, %s21
      %s344 = smul.u32 8, %s21
      %p345 = scmp.lt.s32.totalorder %s344, 15
      %s346 = scalar_select %p345, %s344, 15
      %s347 = smul.addr %s346, 8
      %s348 = scalar_lea.vmem %s9, %s347
      %s349 = smul.u32 8, %s21
      %v350 = vld [vmem:[%s336] sm:$0xff]
      %v351 = vld [vmem:[%s336 + $0x8] sm:$0xff]
      %v352 = vld [vmem:[%s336 + $0x10] sm:$0xff]
      %v353 = vld [vmem:[%s336 + $0x18] sm:$0xff]
      %v354 = vld [vmem:[%s336 + $0x20] sm:$0xff]
      %v355 = vld [vmem:[%s336 + $0x28] sm:$0xff]
      %v356 = vld [vmem:[%s336 + $0x30] sm:$0xff]
      %v357 = vld [vmem:[%s336 + $0x38] sm:$0xff]
      %v358 = vld [vmem:[%s1] sm:$0xff]
      %v359 = vld [vmem:[%s1 + $0x8] sm:$0xff]
      %v360 = vld [vmem:[%s1 + $0x10] sm:$0xff]
      %v361 = vld [vmem:[%s1 + $0x18] sm:$0xff]
      %v362 = vld [vmem:[%s1 + $0x20] sm:$0xff]
      %v363 = vld [vmem:[%s1 + $0x28] sm:$0xff]
      %v364 = vld [vmem:[%s1 + $0x30] sm:$0xff]
      %v365 = vld [vmem:[%s1 + $0x38] sm:$0xff]
      %v366 = vld [vmem:[%s1 + $0x40] sm:$0xff]
      %v367 = vld [vmem:[%s1 + $0x48] sm:$0xff]
      %s368 = scalar_lea.vmem %s1, 80
      %v369 = vld [vmem:[%s368] sm:$0xff]
      %v370 = vld [vmem:[%s368 + $0x8] sm:$0xff]
      %v371 = vld [vmem:[%s368 + $0x10] sm:$0xff]
      %v372 = vld [vmem:[%s368 + $0x18] sm:$0xff]
      %v373 = vld [vmem:[%s368 + $0x20] sm:$0xff]
      %v374 = vld [vmem:[%s368 + $0x28] sm:$0xff]
      %v375 = vld [vmem:[%s368 + $0x30] sm:$0xff]
      %v376 = vld [vmem:[%s368 + $0x38] sm:$0xff]
      %v377 = vld [vmem:[%s368 + $0x40] sm:$0xff]
      %v378 = vld [vmem:[%s368 + $0x48] sm:$0xff]
      %v379 = vld [vmem:[%s2] sm:$0xff]
      %v380 = vld [vmem:[%s2 + $0x8] sm:$0xff]
      %v381 = vld [vmem:[%s5] sm:$0xff]
      %v382 = vld [vmem:[%s5 + $0x8] sm:$0xff]
      %v383 = vld [vmem:[%s7] sm:$0xff]
      %v384 = vld [vmem:[%s6] ss:$0 sm:$0xff]
      %s385 = scalar_lea.vmem %s6, 1
      %v386 = vld [vmem:[%s385] ss:$8 sm:$0x3]
      %v387 = vld [vmem:[%s6 + $0x2] ss:$0 sm:$0xff]
      %v388 = vld [vmem:[%s6 + $0x3] ss:$0 sm:$0xff]
      %v389 = vld [vmem:[%s6 + $0x4] ss:$0 sm:$0xff]
      %v390 = vld [vmem:[%s6 + $0x5] ss:$0 sm:$0xff]
      %v391 = vld [vmem:[%s6 + $0x6] ss:$0 sm:$0xff]
      %vm392 = vcmask 654336
      %v394 = vsel %vm392, %v350, 0
      %v397 = vsel %vm392, %v351, 0
      %v400 = vsel %vm392, %v352, 0
      %v403 = vsel %vm392, %v353, 0
      %v406 = vsel %vm392, %v354, 0
      %v409 = vsel %vm392, %v355, 0
      %v412 = vsel %vm392, %v356, 0
      %v415 = vsel %vm392, %v357, 0
      %417 = vmatprep.subr.mxu0 0.0
      %418 = vmatpush1.msra.mxu0 %v358
      %419 = vmatprep.subr.mxu0 0.0
      %420 = vmatpush1.msra.mxu0 %v359
      %421 = vmatprep.subr.mxu0 0.0
      %422 = vmatpush1.msra.mxu0 %v360
      %423 = vmatprep.subr.mxu0 0.0
      %424 = vmatpush1.msra.mxu0 %v361
      %425 = vmatprep.subr.mxu0 0.0
      %426 = vmatpush1.msra.mxu0 %v362
      %427 = vmatprep.subr.mxu0 0.0
      %428 = vmatpush1.msra.mxu0 %v363
      %429 = vmatprep.subr.mxu0 0.0
      %430 = vmatpush1.msra.mxu0 %v364
      %431 = vmatprep.subr.mxu0 0.0
      %432 = vmatpush1.msra.mxu0 %v365
      %433 = vmatprep.subr.mxu0 0.0
      %434 = vmatpush1.msra.mxu0 %v366
      %435 = vmatprep.subr.mxu0 0.0
      %436 = vmatpush1.msra.mxu0 %v367
      %437 = vmatprep.subr.mxu0 0.0
      %438 = vmatpush1.msra.mxu0 0.0
      %439 = vmatprep.subr.mxu0 0.0
      %440 = vmatpush1.msra.mxu0 0.0
      %441 = vmatprep.subr.mxu0 0.0
      %442 = vmatpush1.msra.mxu0 0.0
      %443 = vmatprep.subr.mxu0 0.0
      %444 = vmatpush1.msra.mxu0 0.0
      %445 = vmatprep.subr.mxu0 0.0
      %446 = vmatpush1.msra.mxu0 0.0
      %447 = vmatprep.subr.mxu0 0.0
      %448 = vmatpush1.msra.mxu0 0.0
      %449 = vmatprep.subr.mxu0 0.0
      %450 = vmatpush1.msra.mxu0 0.0
      %451 = vmatprep.subr.mxu0 0.0
      %452 = vmatpush1.msra.mxu0 0.0
      %453 = vmatprep.subr.mxu0 0.0
      %454 = vmatpush1.msra.mxu0 0.0
      %455 = vmatprep.subr.mxu0 0.0
      %456 = vmatpush1.msra.mxu0 0.0
      %457 = vmatprep.subr.mxu0 0.0
      %458 = vmatpush1.msra.mxu0 0.0
      %459 = vmatprep.subr.mxu0 0.0
      %460 = vmatpush1.msra.mxu0 0.0
      %461 = vmatprep.subr.mxu0 0.0
      %462 = vmatpush1.msra.mxu0 0.0
      %463 = vmatprep.subr.mxu0 0.0
      %464 = vmatpush1.msra.mxu0 0.0
      %465 = vmatprep.subr.mxu0 0.0
      %466 = vmatpush1.msra.mxu0 0.0
      %467 = vmatprep.subr.mxu0 0.0
      %468 = vmatpush1.msra.mxu0 0.0
      %469 = vmatprep.subr.mxu0 0.0
      %470 = vmatpush1.msra.mxu0 0.0
      %471 = vmatprep.subr.mxu0 0.0
      %472 = vmatpush1.msra.mxu0 0.0
      %473 = vmatprep.subr.mxu0 0.0
      %474 = vmatpush1.msra.mxu0 0.0
      %475 = vmatprep.subr.mxu0 0.0
      %476 = vmatpush1.msra.mxu0 0.0
      %477 = vmatprep.subr.mxu0 0.0
      %478 = vmatpush1.msra.mxu0 0.0
      %479 = vmatprep.subr.mxu0 0.0
      %480 = vmatpush1.msra.mxu0 0.0
      %481 = vmatprep.mubr.f32.mxu0 0.0
      %482 = vmatmul.mubr.f32.gmra.mrb[0].mxu0 %v394
      %v483 = vpop.f32.mrb[0].mxu0
      %v484 = vadd.f32 %v384, %v483
      %v485 = vpop.f32.mrb[0].mxu0
      %486 = vmatprep.mubr.f32.mxu0 0.0
      %487 = vmatmul.mubr.f32.gmra.mrb[0].mxu0 %v397
      %v488 = vpop.f32.mrb[0].mxu0
      %v489 = vadd.f32 %v384, %v488
      %v490 = vpop.f32.mrb[0].mxu0
      %491 = vmatprep.mubr.f32.mxu0 0.0
      %492 = vmatmul.mubr.f32.gmra.mrb[0].mxu0 %v400
      %v493 = vpop.f32.mrb[0].mxu0
      %v494 = vadd.f32 %v384, %v493
      %v495 = vpop.f32.mrb[0].mxu0
      %496 = vmatprep.mubr.f32.mxu0 0.0
      %497 = vmatmul.mubr.f32.gmra.mrb[0].mxu0 %v403
      %v498 = vpop.f32.mrb[0].mxu0
      %v499 = vadd.f32 %v384, %v498
      %v500 = vpop.f32.mrb[0].mxu0
      %501 = vmatprep.mubr.f32.mxu0 0.0
      %502 = vmatmul.mubr.f32.gmra.mrb[0].mxu0 %v406
      %v503 = vpop.f32.mrb[0].mxu0
      %v504 = vadd.f32 %v384, %v503
      %v505 = vpop.f32.mrb[0].mxu0
      %506 = vmatprep.mubr.f32.mxu0 0.0
      %507 = vmatmul.mubr.f32.gmra.mrb[0].mxu0 %v409
      %v508 = vpop.f32.mrb[0].mxu0
      %v509 = vadd.f32 %v384, %v508
      %v510 = vpop.f32.mrb[0].mxu0
      %511 = vmatprep.mubr.f32.mxu0 0.0
      %512 = vmatmul.mubr.f32.gmra.mrb[0].mxu0 %v412
      %v513 = vpop.f32.mrb[0].mxu0
      %v514 = vadd.f32 %v384, %v513
      %v515 = vpop.f32.mrb[0].mxu0
      %516 = vmatprep.mubr.f32.mxu0 0.0
      %517 = vmatmul.mubr.f32.gmra.mrb[0].mxu0 %v415
      %v518 = vpop.f32.mrb[0].mxu0
      %v519 = vadd.f32 %v384, %v518
      %v520 = vpop.f32.mrb[0].mxu0
      %521 = vdwg.mxu0
      %v522 = vmax.f32 %v484, 0.0
      %v523 = vmax.f32 %v489, 0.0
      %v524 = vmax.f32 %v494, 0.0
      %v525 = vmax.f32 %v499, 0.0
      %v526 = vmax.f32 %v504, 0.0
      %v527 = vmax.f32 %v509, 0.0
      %v528 = vmax.f32 %v514, 0.0
      %v529 = vmax.f32 %v519, 0.0
      %v530 = vld [vmem:[%s3] sm:$0xff]
      %v531 = vld [vmem:[%s3 + $0x8] sm:$0xff]
      %v532 = vld [vmem:[%s3 + $0x10] sm:$0xff]
      %v533 = vld [vmem:[%s3 + $0x18] sm:$0xff]
      %v534 = vld [vmem:[%s3 + $0x20] sm:$0xff]
      %v535 = vld [vmem:[%s3 + $0x28] sm:$0xff]
      %v536 = vld [vmem:[%s3 + $0x30] sm:$0xff]
      %v537 = vld [vmem:[%s3 + $0x38] sm:$0xff]
      %v538 = vld [vmem:[%s3 + $0x40] sm:$0xff]
      %v539 = vld [vmem:[%s3 + $0x48] sm:$0xff]
      %v540 = vld [vmem:[%s3 + $0x50] sm:$0xff]
      %v541 = vld [vmem:[%s3 + $0x58] sm:$0xff]
      %v542 = vld [vmem:[%s3 + $0x60] sm:$0xff]
      %v543 = vld [vmem:[%s3 + $0x68] sm:$0xff]
      %v544 = vld [vmem:[%s3 + $0x70] sm:$0xff]
      %v545 = vld [vmem:[%s3 + $0x78] sm:$0xff]
      %v546 = vld [vmem:[%s3 + $0x80] sm:$0xff]
      %v547 = vld [vmem:[%s3 + $0x88] sm:$0xff]
      %v548 = vld [vmem:[%s3 + $0x90] sm:$0xff]
      %v549 = vld [vmem:[%s3 + $0x98] sm:$0xff]
      %v550 = vld [vmem:[%s4] sm:$0xff]
      %v552 = vlaneseq
      %v553 = vshrl.u32 %v552, 7
      %v554 = vsub.s32 0, %v553
      %v555 = vrot.slane %v386, %v554
      %v556 = vlaneseq
      %v557 = vshrl.u32 %v556, 7
      %v558 = vsub.s32 1, %v557
      %v559 = vrot.slane %v386, %v558
      %vm562 = vcmask 64512
      %v564 = vsel %vm562, %v522, 0
      %v567 = vsel %vm562, %v523, 0
      %v570 = vsel %vm562, %v524, 0
      %v573 = vsel %vm562, %v525, 0
      %v576 = vsel %vm562, %v526, 0
      %v579 = vsel %vm562, %v527, 0
      %v582 = vsel %vm562, %v528, 0
      %v585 = vsel %vm562, %v529, 0
      %587 = vmatprep.subr.mxu0 %v380
      %588 = vmatpush1.msra.mxu0 %v379
      %589 = vmatprep.subr.mxu0 0.0
      %590 = vmatpush1.msra.mxu0 0.0
      %591 = vmatprep.subr.mxu0 0.0
      %592 = vmatpush1.msra.mxu0 0.0
      %593 = vmatprep.subr.mxu0 0.0
      %594 = vmatpush1.msra.mxu0 0.0
      %595 = vmatprep.subr.mxu0 0.0
      %596 = vmatpush1.msra.mxu0 0.0
      %597 = vmatprep.subr.mxu0 0.0
      %598 = vmatpush1.msra.mxu0 0.0
      %599 = vmatprep.subr.mxu0 0.0
      %600 = vmatpush1.msra.mxu0 0.0
      %601 = vmatprep.subr.mxu0 0.0
      %602 = vmatpush1.msra.mxu0 0.0
      %603 = vmatprep.subr.mxu0 0.0
      %604 = vmatpush1.msra.mxu0 0.0
      %605 = vmatprep.subr.mxu0 0.0
      %606 = vmatpush1.msra.mxu0 0.0
      %607 = vmatprep.subr.mxu0 0.0
      %608 = vmatpush1.msra.mxu0 0.0
      %609 = vmatprep.subr.mxu0 0.0
      %610 = vmatpush1.msra.mxu0 0.0
      %611 = vmatprep.subr.mxu0 0.0
      %612 = vmatpush1.msra.mxu0 0.0
      %613 = vmatprep.subr.mxu0 0.0
      %614 = vmatpush1.msra.mxu0 0.0
      %615 = vmatprep.subr.mxu0 0.0
      %616 = vmatpush1.msra.mxu0 0.0
      %617 = vmatprep.subr.mxu0 0.0
      %618 = vmatpush1.msra.mxu0 0.0
      %619 = vmatprep.subr.mxu0 0.0
      %620 = vmatpush1.msra.mxu0 0.0
      %621 = vmatprep.subr.mxu0 0.0
      %622 = vmatpush1.msra.mxu0 0.0
      %623 = vmatprep.subr.mxu0 0.0
      %624 = vmatpush1.msra.mxu0 0.0
      %625 = vmatprep.subr.mxu0 0.0
      %626 = vmatpush1.msra.mxu0 0.0
      %627 = vmatprep.subr.mxu0 0.0
      %628 = vmatpush1.msra.mxu0 0.0
      %629 = vmatprep.subr.mxu0 0.0
      %630 = vmatpush1.msra.mxu0 0.0
      %631 = vmatprep.subr.mxu0 0.0
      %632 = vmatpush1.msra.mxu0 0.0
      %633 = vmatprep.subr.mxu0 0.0
      %634 = vmatpush1.msra.mxu0 0.0
      %635 = vmatprep.subr.mxu0 0.0
      %636 = vmatpush1.msra.mxu0 0.0
      %637 = vmatprep.subr.mxu0 0.0
      %638 = vmatpush1.msra.mxu0 0.0
      %639 = vmatprep.subr.mxu0 0.0
      %640 = vmatpush1.msra.mxu0 0.0
      %641 = vmatprep.subr.mxu0 0.0
      %642 = vmatpush1.msra.mxu0 0.0
      %643 = vmatprep.subr.mxu0 0.0
      %644 = vmatpush1.msra.mxu0 0.0
      %645 = vmatprep.subr.mxu0 0.0
      %646 = vmatpush1.msra.mxu0 0.0
      %647 = vmatprep.subr.mxu0 0.0
      %648 = vmatpush1.msra.mxu0 0.0
      %649 = vmatprep.subr.mxu0 0.0
      %650 = vmatpush1.msra.mxu0 0.0
      %651 = vmatprep.mubr.f32.mxu0 0.0
      %652 = vmatmul.mubr.f32.gmra.mrb[0].mxu0 %v564
      %v653 = vpop.f32.mrb[0].mxu0
      %v654 = vadd.f32 %v555, %v653
      %v655 = vpop.f32.mrb[0].mxu0
      %v656 = vadd.f32 %v559, %v655
      %657 = vmatprep.mubr.f32.mxu0 0.0
      %658 = vmatmul.mubr.f32.gmra.mrb[0].mxu0 %v567
      %v659 = vpop.f32.mrb[0].mxu0
      %v660 = vadd.f32 %v555, %v659
      %v661 = vpop.f32.mrb[0].mxu0
      %v662 = vadd.f32 %v559, %v661
      %663 = vmatprep.mubr.f32.mxu0 0.0
      %664 = vmatmul.mubr.f32.gmra.mrb[0].mxu0 %v570
      %v665 = vpop.f32.mrb[0].mxu0
      %v666 = vadd.f32 %v555, %v665
      %v667 = vpop.f32.mrb[0].mxu0
      %v668 = vadd.f32 %v559, %v667
      %669 = vmatprep.mubr.f32.mxu0 0.0
      %670 = vmatmul.mubr.f32.gmra.mrb[0].mxu0 %v573
      %v671 = vpop.f32.mrb[0].mxu0
      %v672 = vadd.f32 %v555, %v671
      %v673 = vpop.f32.mrb[0].mxu0
      %v674 = vadd.f32 %v559, %v673
      %675 = vmatprep.mubr.f32.mxu0 0.0
      %676 = vmatmul.mubr.f32.gmra.mrb[0].mxu0 %v576
      %v677 = vpop.f32.mrb[0].mxu0
      %v678 = vadd.f32 %v555, %v677
      %v679 = vpop.f32.mrb[0].mxu0
      %v680 = vadd.f32 %v559, %v679
      %681 = vmatprep.mubr.f32.mxu0 0.0
      %682 = vmatmul.mubr.f32.gmra.mrb[0].mxu0 %v579
      %v683 = vpop.f32.mrb[0].mxu0
      %v684 = vadd.f32 %v555, %v683
      %v685 = vpop.f32.mrb[0].mxu0
      %v686 = vadd.f32 %v559, %v685
      %687 = vmatprep.mubr.f32.mxu0 0.0
      %688 = vmatmul.mubr.f32.gmra.mrb[0].mxu0 %v582
      %v689 = vpop.f32.mrb[0].mxu0
      %v690 = vadd.f32 %v555, %v689
      %v691 = vpop.f32.mrb[0].mxu0
      %v692 = vadd.f32 %v559, %v691
      %693 = vmatprep.mubr.f32.mxu0 0.0
      %694 = vmatmul.mubr.f32.gmra.mrb[0].mxu0 %v585
      %v695 = vpop.f32.mrb[0].mxu0
      %v696 = vadd.f32 %v555, %v695
      %v697 = vpop.f32.mrb[0].mxu0
      %v698 = vadd.f32 %v559, %v697
      %699 = vdwg.mxu0
      %v700 = vmax.f32 %v654, 0.0
      %v701 = vmax.f32 %v656, 0.0
      %v702 = vmax.f32 %v660, 0.0
      %v703 = vmax.f32 %v662, 0.0
      %v704 = vmax.f32 %v666, 0.0
      %v705 = vmax.f32 %v668, 0.0
      %v706 = vmax.f32 %v672, 0.0
      %v707 = vmax.f32 %v674, 0.0
      %v708 = vmax.f32 %v678, 0.0
      %v709 = vmax.f32 %v680, 0.0
      %v710 = vmax.f32 %v684, 0.0
      %v711 = vmax.f32 %v686, 0.0
      %v712 = vmax.f32 %v690, 0.0
      %v713 = vmax.f32 %v692, 0.0
      %v714 = vmax.f32 %v696, 0.0
      %v715 = vmax.f32 %v698, 0.0
      %vm716 = vcmask 261120
      %v718 = vsel %vm716, %v701, 0
      %v721 = vsel %vm716, %v703, 0
      %v724 = vsel %vm716, %v705, 0
      %v727 = vsel %vm716, %v707, 0
      %v730 = vsel %vm716, %v709, 0
      %v733 = vsel %vm716, %v711, 0
      %v736 = vsel %vm716, %v713, 0
      %v739 = vsel %vm716, %v715, 0
      %741 = vmatprep.subr.mxu0 0.0
      %742 = vmatpush1.msra.mxu0 %v530
      %743 = vmatprep.subr.mxu0 0.0
      %744 = vmatpush1.msra.mxu0 %v531
      %745 = vmatprep.subr.mxu0 0.0
      %746 = vmatpush1.msra.mxu0 %v532
      %747 = vmatprep.subr.mxu0 0.0
      %748 = vmatpush1.msra.mxu0 %v533
      %749 = vmatprep.subr.mxu0 0.0
      %750 = vmatpush1.msra.mxu0 %v534
      %751 = vmatprep.subr.mxu0 0.0
      %752 = vmatpush1.msra.mxu0 %v535
      %753 = vmatprep.subr.mxu0 0.0
      %754 = vmatpush1.msra.mxu0 %v536
      %755 = vmatprep.subr.mxu0 0.0
      %756 = vmatpush1.msra.mxu0 %v537
      %757 = vmatprep.subr.mxu0 0.0
      %758 = vmatpush1.msra.mxu0 %v538
      %759 = vmatprep.subr.mxu0 0.0
      %760 = vmatpush1.msra.mxu0 %v539
      %761 = vmatprep.subr.mxu0 0.0
      %762 = vmatpush1.msra.mxu0 %v540
      %763 = vmatprep.subr.mxu0 0.0
      %764 = vmatpush1.msra.mxu0 %v541
      %765 = vmatprep.subr.mxu0 0.0
      %766 = vmatpush1.msra.mxu0 %v542
      %767 = vmatprep.subr.mxu0 0.0
      %768 = vmatpush1.msra.mxu0 %v543
      %769 = vmatprep.subr.mxu0 0.0
      %770 = vmatpush1.msra.mxu0 %v544
      %771 = vmatprep.subr.mxu0 0.0
      %772 = vmatpush1.msra.mxu0 %v545
      %773 = vmatprep.subr.mxu0 0.0
      %774 = vmatpush1.msra.mxu0 %v546
      %775 = vmatprep.subr.mxu0 0.0
      %776 = vmatpush1.msra.mxu0 %v547
      %777 = vmatprep.subr.mxu0 0.0
      %778 = vmatpush1.msra.mxu0 %v548
      %779 = vmatprep.subr.mxu0 0.0
      %780 = vmatpush1.msra.mxu0 %v549
      %781 = vmatprep.subr.mxu0 0.0
      %782 = vmatpush1.msra.mxu0 0.0
      %783 = vmatprep.subr.mxu0 0.0
      %784 = vmatpush1.msra.mxu0 0.0
      %785 = vmatprep.subr.mxu0 0.0
      %786 = vmatpush1.msra.mxu0 0.0
      %787 = vmatprep.subr.mxu0 0.0
      %788 = vmatpush1.msra.mxu0 0.0
      %789 = vmatprep.subr.mxu0 0.0
      %790 = vmatpush1.msra.mxu0 0.0
      %791 = vmatprep.subr.mxu0 0.0
      %792 = vmatpush1.msra.mxu0 0.0
      %793 = vmatprep.subr.mxu0 0.0
      %794 = vmatpush1.msra.mxu0 0.0
      %795 = vmatprep.subr.mxu0 0.0
      %796 = vmatpush1.msra.mxu0 0.0
      %797 = vmatprep.subr.mxu0 0.0
      %798 = vmatpush1.msra.mxu0 0.0
      %799 = vmatprep.subr.mxu0 0.0
      %800 = vmatpush1.msra.mxu0 0.0
      %801 = vmatprep.subr.mxu0 0.0
      %802 = vmatpush1.msra.mxu0 0.0
      %803 = vmatprep.subr.mxu0 0.0
      %804 = vmatpush1.msra.mxu0 0.0
      %805 = vmatprep.mubr.f32.mxu0 %v718
      %806 = vmatmul.mubr.f32.gmra.mrb[0].mxu0 %v700
      %v807 = vpop.f32.mrb[0].mxu0
      %v808 = vadd.f32 %v387, %v807
      %v809 = vpop.f32.mrb[0].mxu0
      %810 = vmatprep.mubr.f32.mxu0 %v721
      %811 = vmatmul.mubr.f32.gmra.mrb[0].mxu0 %v702
      %v812 = vpop.f32.mrb[0].mxu0
      %v813 = vadd.f32 %v387, %v812
      %v814 = vpop.f32.mrb[0].mxu0
      %815 = vmatprep.mubr.f32.mxu0 %v724
      %816 = vmatmul.mubr.f32.gmra.mrb[0].mxu0 %v704
      %v817 = vpop.f32.mrb[0].mxu0
      %v818 = vadd.f32 %v387, %v817
      %v819 = vpop.f32.mrb[0].mxu0
      %820 = vmatprep.mubr.f32.mxu0 %v727
      %821 = vmatmul.mubr.f32.gmra.mrb[0].mxu0 %v706
      %v822 = vpop.f32.mrb[0].mxu0
      %v823 = vadd.f32 %v387, %v822
      %v824 = vpop.f32.mrb[0].mxu0
      %825 = vmatprep.mubr.f32.mxu0 %v730
      %826 = vmatmul.mubr.f32.gmra.mrb[0].mxu0 %v708
      %v827 = vpop.f32.mrb[0].mxu0
      %v828 = vadd.f32 %v387, %v827
      %v829 = vpop.f32.mrb[0].mxu0
      %830 = vmatprep.mubr.f32.mxu0 %v733
      %831 = vmatmul.mubr.f32.gmra.mrb[0].mxu0 %v710
      %v832 = vpop.f32.mrb[0].mxu0
      %v833 = vadd.f32 %v387, %v832
      %v834 = vpop.f32.mrb[0].mxu0
      %835 = vmatprep.mubr.f32.mxu0 %v736
      %836 = vmatmul.mubr.f32.gmra.mrb[0].mxu0 %v712
      %v837 = vpop.f32.mrb[0].mxu0
      %v838 = vadd.f32 %v387, %v837
      %v839 = vpop.f32.mrb[0].mxu0
      %840 = vmatprep.mubr.f32.mxu0 %v739
      %841 = vmatmul.mubr.f32.gmra.mrb[0].mxu0 %v714
      %v842 = vpop.f32.mrb[0].mxu0
      %v843 = vadd.f32 %v387, %v842
      %v844 = vpop.f32.mrb[0].mxu0
      %845 = vdwg.mxu0
      %v846 = vmax.f32 %v808, 0.0
      %v847 = vmax.f32 %v813, 0.0
      %v848 = vmax.f32 %v818, 0.0
      %v849 = vmax.f32 %v823, 0.0
      %v850 = vmax.f32 %v828, 0.0
      %v851 = vmax.f32 %v833, 0.0
      %v852 = vmax.f32 %v838, 0.0
      %v853 = vmax.f32 %v843, 0.0
      %v855 = vsel %vm562, %v846, 0
      %v858 = vsel %vm562, %v847, 0
      %v861 = vsel %vm562, %v848, 0
      %v864 = vsel %vm562, %v849, 0
      %v867 = vsel %vm562, %v850, 0
      %v870 = vsel %vm562, %v851, 0
      %v873 = vsel %vm562, %v852, 0
      %v876 = vsel %vm562, %v853, 0
      %878 = vmatprep.subr.mxu0 0.0
      %879 = vmatpush1.msra.mxu0 %v550
      %880 = vmatprep.subr.mxu0 0.0
      %881 = vmatpush1.msra.mxu0 0.0
      %882 = vmatprep.subr.mxu0 0.0
      %883 = vmatpush1.msra.mxu0 0.0
      %884 = vmatprep.subr.mxu0 0.0
      %885 = vmatpush1.msra.mxu0 0.0
      %886 = vmatprep.subr.mxu0 0.0
      %887 = vmatpush1.msra.mxu0 0.0
      %888 = vmatprep.subr.mxu0 0.0
      %889 = vmatpush1.msra.mxu0 0.0
      %890 = vmatprep.subr.mxu0 0.0
      %891 = vmatpush1.msra.mxu0 0.0
      %892 = vmatprep.subr.mxu0 0.0
      %893 = vmatpush1.msra.mxu0 0.0
      %894 = vmatprep.subr.mxu0 0.0
      %895 = vmatpush1.msra.mxu0 0.0
      %896 = vmatprep.subr.mxu0 0.0
      %897 = vmatpush1.msra.mxu0 0.0
      %898 = vmatprep.subr.mxu0 0.0
      %899 = vmatpush1.msra.mxu0 0.0
      %900 = vmatprep.subr.mxu0 0.0
      %901 = vmatpush1.msra.mxu0 0.0
      %902 = vmatprep.subr.mxu0 0.0
      %903 = vmatpush1.msra.mxu0 0.0
      %904 = vmatprep.subr.mxu0 0.0
      %905 = vmatpush1.msra.mxu0 0.0
      %906 = vmatprep.subr.mxu0 0.0
      %907 = vmatpush1.msra.mxu0 0.0
      %908 = vmatprep.subr.mxu0 0.0
      %909 = vmatpush1.msra.mxu0 0.0
      %910 = vmatprep.subr.mxu0 0.0
      %911 = vmatpush1.msra.mxu0 0.0
      %912 = vmatprep.subr.mxu0 0.0
      %913 = vmatpush1.msra.mxu0 0.0
      %914 = vmatprep.subr.mxu0 0.0
      %915 = vmatpush1.msra.mxu0 0.0
      %916 = vmatprep.subr.mxu0 0.0
      %917 = vmatpush1.msra.mxu0 0.0
      %918 = vmatprep.subr.mxu0 0.0
      %919 = vmatpush1.msra.mxu0 0.0
      %920 = vmatprep.subr.mxu0 0.0
      %921 = vmatpush1.msra.mxu0 0.0
      %922 = vmatprep.subr.mxu0 0.0
      %923 = vmatpush1.msra.mxu0 0.0
      %924 = vmatprep.subr.mxu0 0.0
      %925 = vmatpush1.msra.mxu0 0.0
      %926 = vmatprep.subr.mxu0 0.0
      %927 = vmatpush1.msra.mxu0 0.0
      %928 = vmatprep.subr.mxu0 0.0
      %929 = vmatpush1.msra.mxu0 0.0
      %930 = vmatprep.subr.mxu0 0.0
      %931 = vmatpush1.msra.mxu0 0.0
      %932 = vmatprep.subr.mxu0 0.0
      %933 = vmatpush1.msra.mxu0 0.0
      %934 = vmatprep.subr.mxu0 0.0
      %935 = vmatpush1.msra.mxu0 0.0
      %936 = vmatprep.subr.mxu0 0.0
      %937 = vmatpush1.msra.mxu0 0.0
      %938 = vmatprep.subr.mxu0 0.0
      %939 = vmatpush1.msra.mxu0 0.0
      %940 = vmatprep.subr.mxu0 0.0
      %941 = vmatpush1.msra.mxu0 0.0
      %942 = vmatprep.mubr.f32.mxu0 0.0
      %943 = vmatmul.mubr.f32.gmra.mrb[0].mxu0 %v855
      %v944 = vpop.f32.mrb[0].mxu0
      %v945 = vadd.f32 %v388, %v944
      %v946 = vpop.f32.mrb[0].mxu0
      %947 = vmatprep.mubr.f32.mxu0 0.0
      %948 = vmatmul.mubr.f32.gmra.mrb[0].mxu0 %v858
      %v949 = vpop.f32.mrb[0].mxu0
      %v950 = vadd.f32 %v388, %v949
      %v951 = vpop.f32.mrb[0].mxu0
      %952 = vmatprep.mubr.f32.mxu0 0.0
      %953 = vmatmul.mubr.f32.gmra.mrb[0].mxu0 %v861
      %v954 = vpop.f32.mrb[0].mxu0
      %v955 = vadd.f32 %v388, %v954
      %v956 = vpop.f32.mrb[0].mxu0
      %957 = vmatprep.mubr.f32.mxu0 0.0
      %958 = vmatmul.mubr.f32.gmra.mrb[0].mxu0 %v864
      %v959 = vpop.f32.mrb[0].mxu0
      %v960 = vadd.f32 %v388, %v959
      %v961 = vpop.f32.mrb[0].mxu0
      %962 = vmatprep.mubr.f32.mxu0 0.0
      %963 = vmatmul.mubr.f32.gmra.mrb[0].mxu0 %v867
      %v964 = vpop.f32.mrb[0].mxu0
      %v965 = vadd.f32 %v388, %v964
      %v966 = vpop.f32.mrb[0].mxu0
      %967 = vmatprep.mubr.f32.mxu0 0.0
      %968 = vmatmul.mubr.f32.gmra.mrb[0].mxu0 %v870
      %v969 = vpop.f32.mrb[0].mxu0
      %v970 = vadd.f32 %v388, %v969
      %v971 = vpop.f32.mrb[0].mxu0
      %972 = vmatprep.mubr.f32.mxu0 0.0
      %973 = vmatmul.mubr.f32.gmra.mrb[0].mxu0 %v873
      %v974 = vpop.f32.mrb[0].mxu0
      %v975 = vadd.f32 %v388, %v974
      %v976 = vpop.f32.mrb[0].mxu0
      %977 = vmatprep.mubr.f32.mxu0 0.0
      %978 = vmatmul.mubr.f32.gmra.mrb[0].mxu0 %v876
      %v979 = vpop.f32.mrb[0].mxu0
      %v980 = vadd.f32 %v388, %v979
      %v981 = vpop.f32.mrb[0].mxu0
      %982 = vdwg.mxu0
      %v983 = vmax.f32 %v945, 0.0
      %v984 = vmax.f32 %v950, 0.0
      %v985 = vmax.f32 %v955, 0.0
      %v986 = vmax.f32 %v960, 0.0
      %v987 = vmax.f32 %v965, 0.0
      %v988 = vmax.f32 %v970, 0.0
      %v989 = vmax.f32 %v975, 0.0
      %v990 = vmax.f32 %v980, 0.0
      %vm991 = vcmask 130048
      %v993 = vsel %vm991, %v983, 0
      %v996 = vsel %vm991, %v984, 0
      %v999 = vsel %vm991, %v985, 0
      %v1002 = vsel %vm991, %v986, 0
      %v1005 = vsel %vm991, %v987, 0
      %v1008 = vsel %vm991, %v988, 0
      %v1011 = vsel %vm991, %v989, 0
      %v1014 = vsel %vm991, %v990, 0
      %1016 = vmatprep.subr.mxu0 0.0
      %1017 = vmatpush1.msra.mxu0 %v381
      %1018 = vmatprep.subr.mxu0 0.0
      %1019 = vmatpush1.msra.mxu0 %v382
      %1020 = vmatprep.subr.mxu0 0.0
      %1021 = vmatpush1.msra.mxu0 0.0
      %1022 = vmatprep.subr.mxu0 0.0
      %1023 = vmatpush1.msra.mxu0 0.0
      %1024 = vmatprep.subr.mxu0 0.0
      %1025 = vmatpush1.msra.mxu0 0.0
      %1026 = vmatprep.subr.mxu0 0.0
      %1027 = vmatpush1.msra.mxu0 0.0
      %1028 = vmatprep.subr.mxu0 0.0
      %1029 = vmatpush1.msra.mxu0 0.0
      %1030 = vmatprep.subr.mxu0 0.0
      %1031 = vmatpush1.msra.mxu0 0.0
      %1032 = vmatprep.subr.mxu0 0.0
      %1033 = vmatpush1.msra.mxu0 0.0
      %1034 = vmatprep.subr.mxu0 0.0
      %1035 = vmatpush1.msra.mxu0 0.0
      %1036 = vmatprep.subr.mxu0 0.0
      %1037 = vmatpush1.msra.mxu0 0.0
      %1038 = vmatprep.subr.mxu0 0.0
      %1039 = vmatpush1.msra.mxu0 0.0
      %1040 = vmatprep.subr.mxu0 0.0
      %1041 = vmatpush1.msra.mxu0 0.0
      %1042 = vmatprep.subr.mxu0 0.0
      %1043 = vmatpush1.msra.mxu0 0.0
      %1044 = vmatprep.subr.mxu0 0.0
      %1045 = vmatpush1.msra.mxu0 0.0
      %1046 = vmatprep.subr.mxu0 0.0
      %1047 = vmatpush1.msra.mxu0 0.0
      %1048 = vmatprep.subr.mxu0 0.0
      %1049 = vmatpush1.msra.mxu0 0.0
      %1050 = vmatprep.subr.mxu0 0.0
      %1051 = vmatpush1.msra.mxu0 0.0
      %1052 = vmatprep.subr.mxu0 0.0
      %1053 = vmatpush1.msra.mxu0 0.0
      %1054 = vmatprep.subr.mxu0 0.0
      %1055 = vmatpush1.msra.mxu0 0.0
      %1056 = vmatprep.subr.mxu0 0.0
      %1057 = vmatpush1.msra.mxu0 0.0
      %1058 = vmatprep.subr.mxu0 0.0
      %1059 = vmatpush1.msra.mxu0 0.0
      %1060 = vmatprep.subr.mxu0 0.0
      %1061 = vmatpush1.msra.mxu0 0.0
      %1062 = vmatprep.subr.mxu0 0.0
      %1063 = vmatpush1.msra.mxu0 0.0
      %1064 = vmatprep.subr.mxu0 0.0
      %1065 = vmatpush1.msra.mxu0 0.0
      %1066 = vmatprep.subr.mxu0 0.0
      %1067 = vmatpush1.msra.mxu0 0.0
      %1068 = vmatprep.subr.mxu0 0.0
      %1069 = vmatpush1.msra.mxu0 0.0
      %1070 = vmatprep.subr.mxu0 0.0
      %1071 = vmatpush1.msra.mxu0 0.0
      %1072 = vmatprep.subr.mxu0 0.0
      %1073 = vmatpush1.msra.mxu0 0.0
      %1074 = vmatprep.subr.mxu0 0.0
      %1075 = vmatpush1.msra.mxu0 0.0
      %1076 = vmatprep.subr.mxu0 0.0
      %1077 = vmatpush1.msra.mxu0 0.0
      %1078 = vmatprep.subr.mxu0 0.0
      %1079 = vmatpush1.msra.mxu0 0.0
      %1080 = vmatprep.mubr.f32.mxu0 0.0
      %1081 = vmatmul.mubr.f32.gmra.mrb[0].mxu0 %v993
      %v1082 = vpop.f32.mrb[0].mxu0
      %v1083 = vadd.f32 %v391, %v1082
      %v1084 = vpop.f32.mrb[0].mxu0
      %1085 = vmatprep.mubr.f32.mxu0 0.0
      %1086 = vmatmul.mubr.f32.gmra.mrb[0].mxu0 %v996
      %v1087 = vpop.f32.mrb[0].mxu0
      %v1088 = vadd.f32 %v391, %v1087
      %v1089 = vpop.f32.mrb[0].mxu0
      %1090 = vmatprep.mubr.f32.mxu0 0.0
      %1091 = vmatmul.mubr.f32.gmra.mrb[0].mxu0 %v999
      %v1092 = vpop.f32.mrb[0].mxu0
      %v1093 = vadd.f32 %v391, %v1092
      %v1094 = vpop.f32.mrb[0].mxu0
      %1095 = vmatprep.mubr.f32.mxu0 0.0
      %1096 = vmatmul.mubr.f32.gmra.mrb[0].mxu0 %v1002
      %v1097 = vpop.f32.mrb[0].mxu0
      %v1098 = vadd.f32 %v391, %v1097
      %v1099 = vpop.f32.mrb[0].mxu0
      %1100 = vmatprep.mubr.f32.mxu0 0.0
      %1101 = vmatmul.mubr.f32.gmra.mrb[0].mxu0 %v1005
      %v1102 = vpop.f32.mrb[0].mxu0
      %v1103 = vadd.f32 %v391, %v1102
      %v1104 = vpop.f32.mrb[0].mxu0
      %1105 = vmatprep.mubr.f32.mxu0 0.0
      %1106 = vmatmul.mubr.f32.gmra.mrb[0].mxu0 %v1008
      %v1107 = vpop.f32.mrb[0].mxu0
      %v1108 = vadd.f32 %v391, %v1107
      %v1109 = vpop.f32.mrb[0].mxu0
      %1110 = vmatprep.mubr.f32.mxu0 0.0
      %1111 = vmatmul.mubr.f32.gmra.mrb[0].mxu0 %v1011
      %v1112 = vpop.f32.mrb[0].mxu0
      %v1113 = vadd.f32 %v391, %v1112
      %v1114 = vpop.f32.mrb[0].mxu0
      %1115 = vmatprep.mubr.f32.mxu0 0.0
      %1116 = vmatmul.mubr.f32.gmra.mrb[0].mxu0 %v1014
      %v1117 = vpop.f32.mrb[0].mxu0
      %v1118 = vadd.f32 %v391, %v1117
      %v1119 = vpop.f32.mrb[0].mxu0
      %1120 = vdwg.mxu0
      %v1121 = vxor.u32 %v1083, 2147483648
      %v1122 = vxor.u32 %v1088, 2147483648
      %v1123 = vxor.u32 %v1093, 2147483648
      %v1124 = vxor.u32 %v1098, 2147483648
      %v1125 = vxor.u32 %v1103, 2147483648
      %v1126 = vxor.u32 %v1108, 2147483648
      %v1127 = vxor.u32 %v1113, 2147483648
      %v1128 = vxor.u32 %v1118, 2147483648
      %v1129 = vmul.f32 %v1121, 1.442695
      %v1130 = vpow.pop %v1129
      %v1131 = vmul.f32 %v1122, 1.442695
      %v1132 = vpow.pop %v1131
      %v1133 = vmul.f32 %v1123, 1.442695
      %v1134 = vpow.pop %v1133
      %v1135 = vmul.f32 %v1124, 1.442695
      %v1136 = vpow.pop %v1135
      %v1137 = vmul.f32 %v1125, 1.442695
      %v1138 = vpow.pop %v1137
      %v1139 = vmul.f32 %v1126, 1.442695
      %v1140 = vpow.pop %v1139
      %v1141 = vmul.f32 %v1127, 1.442695
      %v1142 = vpow.pop %v1141
      %v1143 = vmul.f32 %v1128, 1.442695
      %v1144 = vpow.pop %v1143
      %v1145 = vadd.f32 %v1130, 1.0
      %v1146 = vadd.f32 %v1132, 1.0
      %v1147 = vadd.f32 %v1134, 1.0
      %v1148 = vadd.f32 %v1136, 1.0
      %v1149 = vadd.f32 %v1138, 1.0
      %v1150 = vadd.f32 %v1140, 1.0
      %v1151 = vadd.f32 %v1142, 1.0
      %v1152 = vadd.f32 %v1144, 1.0
      %v1153 = vrcp.pop %v1145
      %v1154 = vmul.f32 1.0, %v1153
      %v1155 = vrcp.pop %v1146
      %v1156 = vmul.f32 1.0, %v1155
      %v1157 = vrcp.pop %v1147
      %v1158 = vmul.f32 1.0, %v1157
      %v1159 = vrcp.pop %v1148
      %v1160 = vmul.f32 1.0, %v1159
      %v1161 = vrcp.pop %v1149
      %v1162 = vmul.f32 1.0, %v1161
      %v1163 = vrcp.pop %v1150
      %v1164 = vmul.f32 1.0, %v1163
      %v1165 = vrcp.pop %v1151
      %v1166 = vmul.f32 1.0, %v1165
      %v1167 = vrcp.pop %v1152
      %v1168 = vmul.f32 1.0, %v1167
      %v1170 = vsel %vm562, %v1154, 0
      %v1173 = vsel %vm562, %v1156, 0
      %v1176 = vsel %vm562, %v1158, 0
      %v1179 = vsel %vm562, %v1160, 0
      %v1182 = vsel %vm562, %v1162, 0
      %v1185 = vsel %vm562, %v1164, 0
      %v1188 = vsel %vm562, %v1166, 0
      %v1191 = vsel %vm562, %v1168, 0
      %1193 = vmatprep.subr.mxu0 0.0
      %1194 = vmatpush1.msra.mxu0 %v383
      %1195 = vmatprep.subr.mxu0 0.0
      %1196 = vmatpush1.msra.mxu0 0.0
      %1197 = vmatprep.subr.mxu0 0.0
      %1198 = vmatpush1.msra.mxu0 0.0
      %1199 = vmatprep.subr.mxu0 0.0
      %1200 = vmatpush1.msra.mxu0 0.0
      %1201 = vmatprep.subr.mxu0 0.0
      %1202 = vmatpush1.msra.mxu0 0.0
      %1203 = vmatprep.subr.mxu0 0.0
      %1204 = vmatpush1.msra.mxu0 0.0
      %1205 = vmatprep.subr.mxu0 0.0
      %1206 = vmatpush1.msra.mxu0 0.0
      %1207 = vmatprep.subr.mxu0 0.0
      %1208 = vmatpush1.msra.mxu0 0.0
      %1209 = vmatprep.subr.mxu0 0.0
      %1210 = vmatpush1.msra.mxu0 0.0
      %1211 = vmatprep.subr.mxu0 0.0
      %1212 = vmatpush1.msra.mxu0 0.0
      %1213 = vmatprep.subr.mxu0 0.0
      %1214 = vmatpush1.msra.mxu0 0.0
      %1215 = vmatprep.subr.mxu0 0.0
      %1216 = vmatpush1.msra.mxu0 0.0
      %1217 = vmatprep.subr.mxu0 0.0
      %1218 = vmatpush1.msra.mxu0 0.0
      %1219 = vmatprep.subr.mxu0 0.0
      %1220 = vmatpush1.msra.mxu0 0.0
      %1221 = vmatprep.subr.mxu0 0.0
      %1222 = vmatpush1.msra.mxu0 0.0
      %1223 = vmatprep.subr.mxu0 0.0
      %1224 = vmatpush1.msra.mxu0 0.0
      %1225 = vmatprep.subr.mxu0 0.0
      %1226 = vmatpush1.msra.mxu0 0.0
      %1227 = vmatprep.subr.mxu0 0.0
      %1228 = vmatpush1.msra.mxu0 0.0
      %1229 = vmatprep.subr.mxu0 0.0
      %1230 = vmatpush1.msra.mxu0 0.0
      %1231 = vmatprep.subr.mxu0 0.0
      %1232 = vmatpush1.msra.mxu0 0.0
      %1233 = vmatprep.subr.mxu0 0.0
      %1234 = vmatpush1.msra.mxu0 0.0
      %1235 = vmatprep.subr.mxu0 0.0
      %1236 = vmatpush1.msra.mxu0 0.0
      %1237 = vmatprep.subr.mxu0 0.0
      %1238 = vmatpush1.msra.mxu0 0.0
      %1239 = vmatprep.subr.mxu0 0.0
      %1240 = vmatpush1.msra.mxu0 0.0
      %1241 = vmatprep.subr.mxu0 0.0
      %1242 = vmatpush1.msra.mxu0 0.0
      %1243 = vmatprep.subr.mxu0 0.0
      %1244 = vmatpush1.msra.mxu0 0.0
      %1245 = vmatprep.subr.mxu0 0.0
      %1246 = vmatpush1.msra.mxu0 0.0
      %1247 = vmatprep.subr.mxu0 0.0
      %1248 = vmatpush1.msra.mxu0 0.0
      %1249 = vmatprep.subr.mxu0 0.0
      %1250 = vmatpush1.msra.mxu0 0.0
      %1251 = vmatprep.subr.mxu0 0.0
      %1252 = vmatpush1.msra.mxu0 0.0
      %1253 = vmatprep.subr.mxu0 0.0
      %1254 = vmatpush1.msra.mxu0 0.0
      %1255 = vmatprep.subr.mxu0 0.0
      %1256 = vmatpush1.msra.mxu0 0.0
      %1257 = vmatprep.mubr.f32.mxu0 0.0
      %1258 = vmatmul.mubr.f32.gmra.mrb[0].mxu0 %v1170
      %v1259 = vpop.f32.mrb[0].mxu0
      %v1260 = vadd.f32 0.0, %v1259
      %v1261 = vpop.f32.mrb[0].mxu0
      %1262 = vmatprep.mubr.f32.mxu0 0.0
      %1263 = vmatmul.mubr.f32.gmra.mrb[0].mxu0 %v1173
      %v1264 = vpop.f32.mrb[0].mxu0
      %v1265 = vadd.f32 0.0, %v1264
      %v1266 = vpop.f32.mrb[0].mxu0
      %1267 = vmatprep.mubr.f32.mxu0 0.0
      %1268 = vmatmul.mubr.f32.gmra.mrb[0].mxu0 %v1176
      %v1269 = vpop.f32.mrb[0].mxu0
      %v1270 = vadd.f32 0.0, %v1269
      %v1271 = vpop.f32.mrb[0].mxu0
      %1272 = vmatprep.mubr.f32.mxu0 0.0
      %1273 = vmatmul.mubr.f32.gmra.mrb[0].mxu0 %v1179
      %v1274 = vpop.f32.mrb[0].mxu0
      %v1275 = vadd.f32 0.0, %v1274
      %v1276 = vpop.f32.mrb[0].mxu0
      %1277 = vmatprep.mubr.f32.mxu0 0.0
      %1278 = vmatmul.mubr.f32.gmra.mrb[0].mxu0 %v1182
      %v1279 = vpop.f32.mrb[0].mxu0
      %v1280 = vadd.f32 0.0, %v1279
      %v1281 = vpop.f32.mrb[0].mxu0
      %1282 = vmatprep.mubr.f32.mxu0 0.0
      %1283 = vmatmul.mubr.f32.gmra.mrb[0].mxu0 %v1185
      %v1284 = vpop.f32.mrb[0].mxu0
      %v1285 = vadd.f32 0.0, %v1284
      %v1286 = vpop.f32.mrb[0].mxu0
      %1287 = vmatprep.mubr.f32.mxu0 0.0
      %1288 = vmatmul.mubr.f32.gmra.mrb[0].mxu0 %v1188
      %v1289 = vpop.f32.mrb[0].mxu0
      %v1290 = vadd.f32 0.0, %v1289
      %v1291 = vpop.f32.mrb[0].mxu0
      %1292 = vmatprep.mubr.f32.mxu0 0.0
      %1293 = vmatmul.mubr.f32.gmra.mrb[0].mxu0 %v1191
      %v1294 = vpop.f32.mrb[0].mxu0
      %v1295 = vadd.f32 0.0, %v1294
      %v1296 = vpop.f32.mrb[0].mxu0
      %1297 = vdwg.mxu0
      %v1298 = vsub.f32 %v1260, %v350
      %v1299 = vsub.f32 %v1265, %v351
      %v1300 = vsub.f32 %v1270, %v352
      %v1301 = vsub.f32 %v1275, %v353
      %v1302 = vsub.f32 %v1280, %v354
      %v1303 = vsub.f32 %v1285, %v355
      %v1304 = vsub.f32 %v1290, %v356
      %v1305 = vsub.f32 %v1295, %v357
      %v1306 = vmul.f32 %v1298, %v1298
      %v1307 = vmul.f32 %v1299, %v1299
      %v1308 = vmul.f32 %v1300, %v1300
      %v1309 = vmul.f32 %v1301, %v1301
      %v1310 = vmul.f32 %v1302, %v1302
      %v1311 = vmul.f32 %v1303, %v1303
      %v1312 = vmul.f32 %v1304, %v1304
      %v1313 = vmul.f32 %v1305, %v1305
      %v1315 = vsel %vm392, %v1306, 0
      %v1318 = vsel %vm392, %v1307, 0
      %v1321 = vsel %vm392, %v1308, 0
      %v1324 = vsel %vm392, %v1309, 0
      %v1327 = vsel %vm392, %v1310, 0
      %v1330 = vsel %vm392, %v1311, 0
      %v1333 = vsel %vm392, %v1312, 0
      %v1336 = vsel %vm392, %v1313, 0
      %1338 = vmatprep.subr.mxu0 0.0
      %1339 = vmatpush1.msra.mxu0 %v369
      %1340 = vmatprep.subr.mxu0 0.0
      %1341 = vmatpush1.msra.mxu0 %v370
      %1342 = vmatprep.subr.mxu0 0.0
      %1343 = vmatpush1.msra.mxu0 %v371
      %1344 = vmatprep.subr.mxu0 0.0
      %1345 = vmatpush1.msra.mxu0 %v372
      %1346 = vmatprep.subr.mxu0 0.0
      %1347 = vmatpush1.msra.mxu0 %v373
      %1348 = vmatprep.subr.mxu0 0.0
      %1349 = vmatpush1.msra.mxu0 %v374
      %1350 = vmatprep.subr.mxu0 0.0
      %1351 = vmatpush1.msra.mxu0 %v375
      %1352 = vmatprep.subr.mxu0 0.0
      %1353 = vmatpush1.msra.mxu0 %v376
      %1354 = vmatprep.subr.mxu0 0.0
      %1355 = vmatpush1.msra.mxu0 %v377
      %1356 = vmatprep.subr.mxu0 0.0
      %1357 = vmatpush1.msra.mxu0 %v378
      %1358 = vmatprep.subr.mxu0 0.0
      %1359 = vmatpush1.msra.mxu0 0.0
      %1360 = vmatprep.subr.mxu0 0.0
      %1361 = vmatpush1.msra.mxu0 0.0
      %1362 = vmatprep.subr.mxu0 0.0
      %1363 = vmatpush1.msra.mxu0 0.0
      %1364 = vmatprep.subr.mxu0 0.0
      %1365 = vmatpush1.msra.mxu0 0.0
      %1366 = vmatprep.subr.mxu0 0.0
      %1367 = vmatpush1.msra.mxu0 0.0
      %1368 = vmatprep.subr.mxu0 0.0
      %1369 = vmatpush1.msra.mxu0 0.0
      %1370 = vmatprep.subr.mxu0 0.0
      %1371 = vmatpush1.msra.mxu0 0.0
      %1372 = vmatprep.subr.mxu0 0.0
      %1373 = vmatpush1.msra.mxu0 0.0
      %1374 = vmatprep.subr.mxu0 0.0
      %1375 = vmatpush1.msra.mxu0 0.0
      %1376 = vmatprep.subr.mxu0 0.0
      %1377 = vmatpush1.msra.mxu0 0.0
      %1378 = vmatprep.subr.mxu0 0.0
      %1379 = vmatpush1.msra.mxu0 0.0
      %1380 = vmatprep.subr.mxu0 0.0
      %1381 = vmatpush1.msra.mxu0 0.0
      %1382 = vmatprep.subr.mxu0 0.0
      %1383 = vmatpush1.msra.mxu0 0.0
      %1384 = vmatprep.subr.mxu0 0.0
      %1385 = vmatpush1.msra.mxu0 0.0
      %1386 = vmatprep.subr.mxu0 0.0
      %1387 = vmatpush1.msra.mxu0 0.0
      %1388 = vmatprep.subr.mxu0 0.0
      %1389 = vmatpush1.msra.mxu0 0.0
      %1390 = vmatprep.subr.mxu0 0.0
      %1391 = vmatpush1.msra.mxu0 0.0
      %1392 = vmatprep.subr.mxu0 0.0
      %1393 = vmatpush1.msra.mxu0 0.0
      %1394 = vmatprep.subr.mxu0 0.0
      %1395 = vmatpush1.msra.mxu0 0.0
      %1396 = vmatprep.subr.mxu0 0.0
      %1397 = vmatpush1.msra.mxu0 0.0
      %1398 = vmatprep.subr.mxu0 0.0
      %1399 = vmatpush1.msra.mxu0 0.0
      %1400 = vmatprep.subr.mxu0 0.0
      %1401 = vmatpush1.msra.mxu0 0.0
      %1402 = vmatprep.mubr.f32.mxu0 0.0
      %1403 = vmatmul.mubr.f32.gmra.mrb[0].mxu0 %v1315
      %v1404 = vpop.f32.mrb[0].mxu0
      %v1405 = vadd.f32 0.0, %v1404
      %v1406 = vpop.f32.mrb[0].mxu0
      %1407 = vmatprep.mubr.f32.mxu0 0.0
      %1408 = vmatmul.mubr.f32.gmra.mrb[0].mxu0 %v1318
      %v1409 = vpop.f32.mrb[0].mxu0
      %v1410 = vadd.f32 0.0, %v1409
      %v1411 = vpop.f32.mrb[0].mxu0
      %1412 = vmatprep.mubr.f32.mxu0 0.0
      %1413 = vmatmul.mubr.f32.gmra.mrb[0].mxu0 %v1321
      %v1414 = vpop.f32.mrb[0].mxu0
      %v1415 = vadd.f32 0.0, %v1414
      %v1416 = vpop.f32.mrb[0].mxu0
      %1417 = vmatprep.mubr.f32.mxu0 0.0
      %1418 = vmatmul.mubr.f32.gmra.mrb[0].mxu0 %v1324
      %v1419 = vpop.f32.mrb[0].mxu0
      %v1420 = vadd.f32 0.0, %v1419
      %v1421 = vpop.f32.mrb[0].mxu0
      %1422 = vmatprep.mubr.f32.mxu0 0.0
      %1423 = vmatmul.mubr.f32.gmra.mrb[0].mxu0 %v1327
      %v1424 = vpop.f32.mrb[0].mxu0
      %v1425 = vadd.f32 0.0, %v1424
      %v1426 = vpop.f32.mrb[0].mxu0
      %1427 = vmatprep.mubr.f32.mxu0 0.0
      %1428 = vmatmul.mubr.f32.gmra.mrb[0].mxu0 %v1330
      %v1429 = vpop.f32.mrb[0].mxu0
      %v1430 = vadd.f32 0.0, %v1429
      %v1431 = vpop.f32.mrb[0].mxu0
      %1432 = vmatprep.mubr.f32.mxu0 0.0
      %1433 = vmatmul.mubr.f32.gmra.mrb[0].mxu0 %v1333
      %v1434 = vpop.f32.mrb[0].mxu0
      %v1435 = vadd.f32 0.0, %v1434
      %v1436 = vpop.f32.mrb[0].mxu0
      %1437 = vmatprep.mubr.f32.mxu0 0.0
      %1438 = vmatmul.mubr.f32.gmra.mrb[0].mxu0 %v1336
      %v1439 = vpop.f32.mrb[0].mxu0
      %v1440 = vadd.f32 0.0, %v1439
      %v1441 = vpop.f32.mrb[0].mxu0
      %1442 = vdwg.mxu0
      %1443 = vmatprep.subr.mxu0 0.0
      %1444 = vmatpush1.msra.mxu0 %v358
      %1445 = vmatprep.subr.mxu0 0.0
      %1446 = vmatpush1.msra.mxu0 %v359
      %1447 = vmatprep.subr.mxu0 0.0
      %1448 = vmatpush1.msra.mxu0 %v360
      %1449 = vmatprep.subr.mxu0 0.0
      %1450 = vmatpush1.msra.mxu0 %v361
      %1451 = vmatprep.subr.mxu0 0.0
      %1452 = vmatpush1.msra.mxu0 %v362
      %1453 = vmatprep.subr.mxu0 0.0
      %1454 = vmatpush1.msra.mxu0 %v363
      %1455 = vmatprep.subr.mxu0 0.0
      %1456 = vmatpush1.msra.mxu0 %v364
      %1457 = vmatprep.subr.mxu0 0.0
      %1458 = vmatpush1.msra.mxu0 %v365
      %1459 = vmatprep.subr.mxu0 0.0
      %1460 = vmatpush1.msra.mxu0 %v366
      %1461 = vmatprep.subr.mxu0 0.0
      %1462 = vmatpush1.msra.mxu0 %v367
      %1463 = vmatprep.subr.mxu0 0.0
      %1464 = vmatpush1.msra.mxu0 0.0
      %1465 = vmatprep.subr.mxu0 0.0
      %1466 = vmatpush1.msra.mxu0 0.0
      %1467 = vmatprep.subr.mxu0 0.0
      %1468 = vmatpush1.msra.mxu0 0.0
      %1469 = vmatprep.subr.mxu0 0.0
      %1470 = vmatpush1.msra.mxu0 0.0
      %1471 = vmatprep.subr.mxu0 0.0
      %1472 = vmatpush1.msra.mxu0 0.0
      %1473 = vmatprep.subr.mxu0 0.0
      %1474 = vmatpush1.msra.mxu0 0.0
      %1475 = vmatprep.subr.mxu0 0.0
      %1476 = vmatpush1.msra.mxu0 0.0
      %1477 = vmatprep.subr.mxu0 0.0
      %1478 = vmatpush1.msra.mxu0 0.0
      %1479 = vmatprep.subr.mxu0 0.0
      %1480 = vmatpush1.msra.mxu0 0.0
      %1481 = vmatprep.subr.mxu0 0.0
      %1482 = vmatpush1.msra.mxu0 0.0
      %1483 = vmatprep.subr.mxu0 0.0
      %1484 = vmatpush1.msra.mxu0 0.0
      %1485 = vmatprep.subr.mxu0 0.0
      %1486 = vmatpush1.msra.mxu0 0.0
      %1487 = vmatprep.subr.mxu0 0.0
      %1488 = vmatpush1.msra.mxu0 0.0
      %1489 = vmatprep.subr.mxu0 0.0
      %1490 = vmatpush1.msra.mxu0 0.0
      %1491 = vmatprep.subr.mxu0 0.0
      %1492 = vmatpush1.msra.mxu0 0.0
      %1493 = vmatprep.subr.mxu0 0.0
      %1494 = vmatpush1.msra.mxu0 0.0
      %1495 = vmatprep.subr.mxu0 0.0
      %1496 = vmatpush1.msra.mxu0 0.0
      %1497 = vmatprep.subr.mxu0 0.0
      %1498 = vmatpush1.msra.mxu0 0.0
      %1499 = vmatprep.subr.mxu0 0.0
      %1500 = vmatpush1.msra.mxu0 0.0
      %1501 = vmatprep.subr.mxu0 0.0
      %1502 = vmatpush1.msra.mxu0 0.0
      %1503 = vmatprep.subr.mxu0 0.0
      %1504 = vmatpush1.msra.mxu0 0.0
      %1505 = vmatprep.subr.mxu0 0.0
      %1506 = vmatpush1.msra.mxu0 0.0
      %1507 = vmatprep.mubr.f32.mxu0 0.0
      %1508 = vmatmul.mubr.f32.gmra.mrb[0].mxu0 %v394
      %v1509 = vpop.f32.mrb[0].mxu0
      %v1510 = vadd.f32 %v1405, %v1509
      %v1511 = vpop.f32.mrb[0].mxu0
      %1512 = vmatprep.mubr.f32.mxu0 0.0
      %1513 = vmatmul.mubr.f32.gmra.mrb[0].mxu0 %v397
      %v1514 = vpop.f32.mrb[0].mxu0
      %v1515 = vadd.f32 %v1410, %v1514
      %v1516 = vpop.f32.mrb[0].mxu0
      %1517 = vmatprep.mubr.f32.mxu0 0.0
      %1518 = vmatmul.mubr.f32.gmra.mrb[0].mxu0 %v400
      %v1519 = vpop.f32.mrb[0].mxu0
      %v1520 = vadd.f32 %v1415, %v1519
      %v1521 = vpop.f32.mrb[0].mxu0
      %1522 = vmatprep.mubr.f32.mxu0 0.0
      %1523 = vmatmul.mubr.f32.gmra.mrb[0].mxu0 %v403
      %v1524 = vpop.f32.mrb[0].mxu0
      %v1525 = vadd.f32 %v1420, %v1524
      %v1526 = vpop.f32.mrb[0].mxu0
      %1527 = vmatprep.mubr.f32.mxu0 0.0
      %1528 = vmatmul.mubr.f32.gmra.mrb[0].mxu0 %v406
      %v1529 = vpop.f32.mrb[0].mxu0
      %v1530 = vadd.f32 %v1425, %v1529
      %v1531 = vpop.f32.mrb[0].mxu0
      %1532 = vmatprep.mubr.f32.mxu0 0.0
      %1533 = vmatmul.mubr.f32.gmra.mrb[0].mxu0 %v409
      %v1534 = vpop.f32.mrb[0].mxu0
      %v1535 = vadd.f32 %v1430, %v1534
      %v1536 = vpop.f32.mrb[0].mxu0
      %1537 = vmatprep.mubr.f32.mxu0 0.0
      %1538 = vmatmul.mubr.f32.gmra.mrb[0].mxu0 %v412
      %v1539 = vpop.f32.mrb[0].mxu0
      %v1540 = vadd.f32 %v1435, %v1539
      %v1541 = vpop.f32.mrb[0].mxu0
      %1542 = vmatprep.mubr.f32.mxu0 0.0
      %1543 = vmatmul.mubr.f32.gmra.mrb[0].mxu0 %v415
      %v1544 = vpop.f32.mrb[0].mxu0
      %v1545 = vadd.f32 %v1440, %v1544
      %v1546 = vpop.f32.mrb[0].mxu0
      %1547 = vdwg.mxu0
      %v1548 = vadd.f32 %v1510, %v384
      %v1549 = vadd.f32 %v1515, %v384
      %v1550 = vadd.f32 %v1520, %v384
      %v1551 = vadd.f32 %v1525, %v384
      %v1552 = vadd.f32 %v1530, %v384
      %v1553 = vadd.f32 %v1535, %v384
      %v1554 = vadd.f32 %v1540, %v384
      %v1555 = vadd.f32 %v1545, %v384
      %v1556 = vmax.f32 %v1548, 0.0
      %v1557 = vmax.f32 %v1549, 0.0
      %v1558 = vmax.f32 %v1550, 0.0
      %v1559 = vmax.f32 %v1551, 0.0
      %v1560 = vmax.f32 %v1552, 0.0
      %v1561 = vmax.f32 %v1553, 0.0
      %v1562 = vmax.f32 %v1554, 0.0
      %v1563 = vmax.f32 %v1555, 0.0
      %s1564 = scalar_lea.vmem %s3, 160
      %v1565 = vld [vmem:[%s1564] sm:$0xff]
      %v1566 = vld [vmem:[%s1564 + $0x8] sm:$0xff]
      %v1567 = vld [vmem:[%s1564 + $0x10] sm:$0xff]
      %v1568 = vld [vmem:[%s1564 + $0x18] sm:$0xff]
      %v1569 = vld [vmem:[%s1564 + $0x20] sm:$0xff]
      %v1570 = vld [vmem:[%s1564 + $0x28] sm:$0xff]
      %v1571 = vld [vmem:[%s1564 + $0x30] sm:$0xff]
      %v1572 = vld [vmem:[%s1564 + $0x38] sm:$0xff]
      %v1573 = vld [vmem:[%s1564 + $0x40] sm:$0xff]
      %v1574 = vld [vmem:[%s1564 + $0x48] sm:$0xff]
      %v1575 = vld [vmem:[%s1564 + $0x50] sm:$0xff]
      %v1576 = vld [vmem:[%s1564 + $0x58] sm:$0xff]
      %v1577 = vld [vmem:[%s1564 + $0x60] sm:$0xff]
      %v1578 = vld [vmem:[%s1564 + $0x68] sm:$0xff]
      %v1579 = vld [vmem:[%s1564 + $0x70] sm:$0xff]
      %v1580 = vld [vmem:[%s1564 + $0x78] sm:$0xff]
      %v1581 = vld [vmem:[%s1564 + $0x80] sm:$0xff]
      %v1582 = vld [vmem:[%s1564 + $0x88] sm:$0xff]
      %v1583 = vld [vmem:[%s1564 + $0x90] sm:$0xff]
      %v1584 = vld [vmem:[%s1564 + $0x98] sm:$0xff]
      %s1585 = scalar_lea.vmem %s4, 8
      %v1586 = vld [vmem:[%s1585] sm:$0xff]
      %v1588 = vsel %vm562, %v1556, 0
      %v1591 = vsel %vm562, %v1557, 0
      %v1594 = vsel %vm562, %v1558, 0
      %v1597 = vsel %vm562, %v1559, 0
      %v1600 = vsel %vm562, %v1560, 0
      %v1603 = vsel %vm562, %v1561, 0
      %v1606 = vsel %vm562, %v1562, 0
      %v1609 = vsel %vm562, %v1563, 0
      %1611 = vmatprep.subr.mxu0 %v380
      %1612 = vmatpush1.msra.mxu0 %v379
      %1613 = vmatprep.subr.mxu0 0.0
      %1614 = vmatpush1.msra.mxu0 0.0
      %1615 = vmatprep.subr.mxu0 0.0
      %1616 = vmatpush1.msra.mxu0 0.0
      %1617 = vmatprep.subr.mxu0 0.0
      %1618 = vmatpush1.msra.mxu0 0.0
      %1619 = vmatprep.subr.mxu0 0.0
      %1620 = vmatpush1.msra.mxu0 0.0
      %1621 = vmatprep.subr.mxu0 0.0
      %1622 = vmatpush1.msra.mxu0 0.0
      %1623 = vmatprep.subr.mxu0 0.0
      %1624 = vmatpush1.msra.mxu0 0.0
      %1625 = vmatprep.subr.mxu0 0.0
      %1626 = vmatpush1.msra.mxu0 0.0
      %1627 = vmatprep.subr.mxu0 0.0
      %1628 = vmatpush1.msra.mxu0 0.0
      %1629 = vmatprep.subr.mxu0 0.0
      %1630 = vmatpush1.msra.mxu0 0.0
      %1631 = vmatprep.subr.mxu0 0.0
      %1632 = vmatpush1.msra.mxu0 0.0
      %1633 = vmatprep.subr.mxu0 0.0
      %1634 = vmatpush1.msra.mxu0 0.0
      %1635 = vmatprep.subr.mxu0 0.0
      %1636 = vmatpush1.msra.mxu0 0.0
      %1637 = vmatprep.subr.mxu0 0.0
      %1638 = vmatpush1.msra.mxu0 0.0
      %1639 = vmatprep.subr.mxu0 0.0
      %1640 = vmatpush1.msra.mxu0 0.0
      %1641 = vmatprep.subr.mxu0 0.0
      %1642 = vmatpush1.msra.mxu0 0.0
      %1643 = vmatprep.subr.mxu0 0.0
      %1644 = vmatpush1.msra.mxu0 0.0
      %1645 = vmatprep.subr.mxu0 0.0
      %1646 = vmatpush1.msra.mxu0 0.0
      %1647 = vmatprep.subr.mxu0 0.0
      %1648 = vmatpush1.msra.mxu0 0.0
      %1649 = vmatprep.subr.mxu0 0.0
      %1650 = vmatpush1.msra.mxu0 0.0
      %1651 = vmatprep.subr.mxu0 0.0
      %1652 = vmatpush1.msra.mxu0 0.0
      %1653 = vmatprep.subr.mxu0 0.0
      %1654 = vmatpush1.msra.mxu0 0.0
      %1655 = vmatprep.subr.mxu0 0.0
      %1656 = vmatpush1.msra.mxu0 0.0
      %1657 = vmatprep.subr.mxu0 0.0
      %1658 = vmatpush1.msra.mxu0 0.0
      %1659 = vmatprep.subr.mxu0 0.0
      %1660 = vmatpush1.msra.mxu0 0.0
      %1661 = vmatprep.subr.mxu0 0.0
      %1662 = vmatpush1.msra.mxu0 0.0
      %1663 = vmatprep.subr.mxu0 0.0
      %1664 = vmatpush1.msra.mxu0 0.0
      %1665 = vmatprep.subr.mxu0 0.0
      %1666 = vmatpush1.msra.mxu0 0.0
      %1667 = vmatprep.subr.mxu0 0.0
      %1668 = vmatpush1.msra.mxu0 0.0
      %1669 = vmatprep.subr.mxu0 0.0
      %1670 = vmatpush1.msra.mxu0 0.0
      %1671 = vmatprep.subr.mxu0 0.0
      %1672 = vmatpush1.msra.mxu0 0.0
      %1673 = vmatprep.subr.mxu0 0.0
      %1674 = vmatpush1.msra.mxu0 0.0
      %1675 = vmatprep.mubr.f32.mxu0 0.0
      %1676 = vmatmul.mubr.f32.gmra.mrb[0].mxu0 %v1588
      %v1677 = vpop.f32.mrb[0].mxu0
      %v1678 = vadd.f32 %v555, %v1677
      %v1679 = vpop.f32.mrb[0].mxu0
      %v1680 = vadd.f32 %v559, %v1679
      %1681 = vmatprep.mubr.f32.mxu0 0.0
      %1682 = vmatmul.mubr.f32.gmra.mrb[0].mxu0 %v1591
      %v1683 = vpop.f32.mrb[0].mxu0
      %v1684 = vadd.f32 %v555, %v1683
      %v1685 = vpop.f32.mrb[0].mxu0
      %v1686 = vadd.f32 %v559, %v1685
      %1687 = vmatprep.mubr.f32.mxu0 0.0
      %1688 = vmatmul.mubr.f32.gmra.mrb[0].mxu0 %v1594
      %v1689 = vpop.f32.mrb[0].mxu0
      %v1690 = vadd.f32 %v555, %v1689
      %v1691 = vpop.f32.mrb[0].mxu0
      %v1692 = vadd.f32 %v559, %v1691
      %1693 = vmatprep.mubr.f32.mxu0 0.0
      %1694 = vmatmul.mubr.f32.gmra.mrb[0].mxu0 %v1597
      %v1695 = vpop.f32.mrb[0].mxu0
      %v1696 = vadd.f32 %v555, %v1695
      %v1697 = vpop.f32.mrb[0].mxu0
      %v1698 = vadd.f32 %v559, %v1697
      %1699 = vmatprep.mubr.f32.mxu0 0.0
      %1700 = vmatmul.mubr.f32.gmra.mrb[0].mxu0 %v1600
      %v1701 = vpop.f32.mrb[0].mxu0
      %v1702 = vadd.f32 %v555, %v1701
      %v1703 = vpop.f32.mrb[0].mxu0
      %v1704 = vadd.f32 %v559, %v1703
      %1705 = vmatprep.mubr.f32.mxu0 0.0
      %1706 = vmatmul.mubr.f32.gmra.mrb[0].mxu0 %v1603
      %v1707 = vpop.f32.mrb[0].mxu0
      %v1708 = vadd.f32 %v555, %v1707
      %v1709 = vpop.f32.mrb[0].mxu0
      %v1710 = vadd.f32 %v559, %v1709
      %1711 = vmatprep.mubr.f32.mxu0 0.0
      %1712 = vmatmul.mubr.f32.gmra.mrb[0].mxu0 %v1606
      %v1713 = vpop.f32.mrb[0].mxu0
      %v1714 = vadd.f32 %v555, %v1713
      %v1715 = vpop.f32.mrb[0].mxu0
      %v1716 = vadd.f32 %v559, %v1715
      %1717 = vmatprep.mubr.f32.mxu0 0.0
      %1718 = vmatmul.mubr.f32.gmra.mrb[0].mxu0 %v1609
      %v1719 = vpop.f32.mrb[0].mxu0
      %v1720 = vadd.f32 %v555, %v1719
      %v1721 = vpop.f32.mrb[0].mxu0
      %v1722 = vadd.f32 %v559, %v1721
      %1723 = vdwg.mxu0
      %v1724 = vmax.f32 %v1678, 0.0
      %v1725 = vmax.f32 %v1680, 0.0
      %v1726 = vmax.f32 %v1684, 0.0
      %v1727 = vmax.f32 %v1686, 0.0
      %v1728 = vmax.f32 %v1690, 0.0
      %v1729 = vmax.f32 %v1692, 0.0
      %v1730 = vmax.f32 %v1696, 0.0
      %v1731 = vmax.f32 %v1698, 0.0
      %v1732 = vmax.f32 %v1702, 0.0
      %v1733 = vmax.f32 %v1704, 0.0
      %v1734 = vmax.f32 %v1708, 0.0
      %v1735 = vmax.f32 %v1710, 0.0
      %v1736 = vmax.f32 %v1714, 0.0
      %v1737 = vmax.f32 %v1716, 0.0
      %v1738 = vmax.f32 %v1720, 0.0
      %v1739 = vmax.f32 %v1722, 0.0
      %v1741 = vsel %vm716, %v1725, 0
      %v1744 = vsel %vm716, %v1727, 0
      %v1747 = vsel %vm716, %v1729, 0
      %v1750 = vsel %vm716, %v1731, 0
      %v1753 = vsel %vm716, %v1733, 0
      %v1756 = vsel %vm716, %v1735, 0
      %v1759 = vsel %vm716, %v1737, 0
      %v1762 = vsel %vm716, %v1739, 0
      %1764 = vmatprep.subr.mxu0 0.0
      %1765 = vmatpush1.msra.mxu0 %v1565
      %1766 = vmatprep.subr.mxu0 0.0
      %1767 = vmatpush1.msra.mxu0 %v1566
      %1768 = vmatprep.subr.mxu0 0.0
      %1769 = vmatpush1.msra.mxu0 %v1567
      %1770 = vmatprep.subr.mxu0 0.0
      %1771 = vmatpush1.msra.mxu0 %v1568
      %1772 = vmatprep.subr.mxu0 0.0
      %1773 = vmatpush1.msra.mxu0 %v1569
      %1774 = vmatprep.subr.mxu0 0.0
      %1775 = vmatpush1.msra.mxu0 %v1570
      %1776 = vmatprep.subr.mxu0 0.0
      %1777 = vmatpush1.msra.mxu0 %v1571
      %1778 = vmatprep.subr.mxu0 0.0
      %1779 = vmatpush1.msra.mxu0 %v1572
      %1780 = vmatprep.subr.mxu0 0.0
      %1781 = vmatpush1.msra.mxu0 %v1573
      %1782 = vmatprep.subr.mxu0 0.0
      %1783 = vmatpush1.msra.mxu0 %v1574
      %1784 = vmatprep.subr.mxu0 0.0
      %1785 = vmatpush1.msra.mxu0 %v1575
      %1786 = vmatprep.subr.mxu0 0.0
      %1787 = vmatpush1.msra.mxu0 %v1576
      %1788 = vmatprep.subr.mxu0 0.0
      %1789 = vmatpush1.msra.mxu0 %v1577
      %1790 = vmatprep.subr.mxu0 0.0
      %1791 = vmatpush1.msra.mxu0 %v1578
      %1792 = vmatprep.subr.mxu0 0.0
      %1793 = vmatpush1.msra.mxu0 %v1579
      %1794 = vmatprep.subr.mxu0 0.0
      %1795 = vmatpush1.msra.mxu0 %v1580
      %1796 = vmatprep.subr.mxu0 0.0
      %1797 = vmatpush1.msra.mxu0 %v1581
      %1798 = vmatprep.subr.mxu0 0.0
      %1799 = vmatpush1.msra.mxu0 %v1582
      %1800 = vmatprep.subr.mxu0 0.0
      %1801 = vmatpush1.msra.mxu0 %v1583
      %1802 = vmatprep.subr.mxu0 0.0
      %1803 = vmatpush1.msra.mxu0 %v1584
      %1804 = vmatprep.subr.mxu0 0.0
      %1805 = vmatpush1.msra.mxu0 0.0
      %1806 = vmatprep.subr.mxu0 0.0
      %1807 = vmatpush1.msra.mxu0 0.0
      %1808 = vmatprep.subr.mxu0 0.0
      %1809 = vmatpush1.msra.mxu0 0.0
      %1810 = vmatprep.subr.mxu0 0.0
      %1811 = vmatpush1.msra.mxu0 0.0
      %1812 = vmatprep.subr.mxu0 0.0
      %1813 = vmatpush1.msra.mxu0 0.0
      %1814 = vmatprep.subr.mxu0 0.0
      %1815 = vmatpush1.msra.mxu0 0.0
      %1816 = vmatprep.subr.mxu0 0.0
      %1817 = vmatpush1.msra.mxu0 0.0
      %1818 = vmatprep.subr.mxu0 0.0
      %1819 = vmatpush1.msra.mxu0 0.0
      %1820 = vmatprep.subr.mxu0 0.0
      %1821 = vmatpush1.msra.mxu0 0.0
      %1822 = vmatprep.subr.mxu0 0.0
      %1823 = vmatpush1.msra.mxu0 0.0
      %1824 = vmatprep.subr.mxu0 0.0
      %1825 = vmatpush1.msra.mxu0 0.0
      %1826 = vmatprep.subr.mxu0 0.0
      %1827 = vmatpush1.msra.mxu0 0.0
      %1828 = vmatprep.mubr.f32.mxu0 %v1741
      %1829 = vmatmul.mubr.f32.gmra.mrb[0].mxu0 %v1724
      %v1830 = vpop.f32.mrb[0].mxu0
      %v1831 = vadd.f32 %v389, %v1830
      %v1832 = vpop.f32.mrb[0].mxu0
      %1833 = vmatprep.mubr.f32.mxu0 %v1744
      %1834 = vmatmul.mubr.f32.gmra.mrb[0].mxu0 %v1726
      %v1835 = vpop.f32.mrb[0].mxu0
      %v1836 = vadd.f32 %v389, %v1835
      %v1837 = vpop.f32.mrb[0].mxu0
      %1838 = vmatprep.mubr.f32.mxu0 %v1747
      %1839 = vmatmul.mubr.f32.gmra.mrb[0].mxu0 %v1728
      %v1840 = vpop.f32.mrb[0].mxu0
      %v1841 = vadd.f32 %v389, %v1840
      %v1842 = vpop.f32.mrb[0].mxu0
      %1843 = vmatprep.mubr.f32.mxu0 %v1750
      %1844 = vmatmul.mubr.f32.gmra.mrb[0].mxu0 %v1730
      %v1845 = vpop.f32.mrb[0].mxu0
      %v1846 = vadd.f32 %v389, %v1845
      %v1847 = vpop.f32.mrb[0].mxu0
      %1848 = vmatprep.mubr.f32.mxu0 %v1753
      %1849 = vmatmul.mubr.f32.gmra.mrb[0].mxu0 %v1732
      %v1850 = vpop.f32.mrb[0].mxu0
      %v1851 = vadd.f32 %v389, %v1850
      %v1852 = vpop.f32.mrb[0].mxu0
      %1853 = vmatprep.mubr.f32.mxu0 %v1756
      %1854 = vmatmul.mubr.f32.gmra.mrb[0].mxu0 %v1734
      %v1855 = vpop.f32.mrb[0].mxu0
      %v1856 = vadd.f32 %v389, %v1855
      %v1857 = vpop.f32.mrb[0].mxu0
      %1858 = vmatprep.mubr.f32.mxu0 %v1759
      %1859 = vmatmul.mubr.f32.gmra.mrb[0].mxu0 %v1736
      %v1860 = vpop.f32.mrb[0].mxu0
      %v1861 = vadd.f32 %v389, %v1860
      %v1862 = vpop.f32.mrb[0].mxu0
      %1863 = vmatprep.mubr.f32.mxu0 %v1762
      %1864 = vmatmul.mubr.f32.gmra.mrb[0].mxu0 %v1738
      %v1865 = vpop.f32.mrb[0].mxu0
      %v1866 = vadd.f32 %v389, %v1865
      %v1867 = vpop.f32.mrb[0].mxu0
      %1868 = vdwg.mxu0
      %v1869 = vmax.f32 %v1831, 0.0
      %v1870 = vmax.f32 %v1836, 0.0
      %v1871 = vmax.f32 %v1841, 0.0
      %v1872 = vmax.f32 %v1846, 0.0
      %v1873 = vmax.f32 %v1851, 0.0
      %v1874 = vmax.f32 %v1856, 0.0
      %v1875 = vmax.f32 %v1861, 0.0
      %v1876 = vmax.f32 %v1866, 0.0
      %v1878 = vsel %vm562, %v1869, 0
      %v1881 = vsel %vm562, %v1870, 0
      %v1884 = vsel %vm562, %v1871, 0
      %v1887 = vsel %vm562, %v1872, 0
      %v1890 = vsel %vm562, %v1873, 0
      %v1893 = vsel %vm562, %v1874, 0
      %v1896 = vsel %vm562, %v1875, 0
      %v1899 = vsel %vm562, %v1876, 0
      %1901 = vmatprep.subr.mxu0 0.0
      %1902 = vmatpush1.msra.mxu0 %v1586
      %1903 = vmatprep.subr.mxu0 0.0
      %1904 = vmatpush1.msra.mxu0 0.0
      %1905 = vmatprep.subr.mxu0 0.0
      %1906 = vmatpush1.msra.mxu0 0.0
      %1907 = vmatprep.subr.mxu0 0.0
      %1908 = vmatpush1.msra.mxu0 0.0
      %1909 = vmatprep.subr.mxu0 0.0
      %1910 = vmatpush1.msra.mxu0 0.0
      %1911 = vmatprep.subr.mxu0 0.0
      %1912 = vmatpush1.msra.mxu0 0.0
      %1913 = vmatprep.subr.mxu0 0.0
      %1914 = vmatpush1.msra.mxu0 0.0
      %1915 = vmatprep.subr.mxu0 0.0
      %1916 = vmatpush1.msra.mxu0 0.0
      %1917 = vmatprep.subr.mxu0 0.0
      %1918 = vmatpush1.msra.mxu0 0.0
      %1919 = vmatprep.subr.mxu0 0.0
      %1920 = vmatpush1.msra.mxu0 0.0
      %1921 = vmatprep.subr.mxu0 0.0
      %1922 = vmatpush1.msra.mxu0 0.0
      %1923 = vmatprep.subr.mxu0 0.0
      %1924 = vmatpush1.msra.mxu0 0.0
      %1925 = vmatprep.subr.mxu0 0.0
      %1926 = vmatpush1.msra.mxu0 0.0
      %1927 = vmatprep.subr.mxu0 0.0
      %1928 = vmatpush1.msra.mxu0 0.0
      %1929 = vmatprep.subr.mxu0 0.0
      %1930 = vmatpush1.msra.mxu0 0.0
      %1931 = vmatprep.subr.mxu0 0.0
      %1932 = vmatpush1.msra.mxu0 0.0
      %1933 = vmatprep.subr.mxu0 0.0
      %1934 = vmatpush1.msra.mxu0 0.0
      %1935 = vmatprep.subr.mxu0 0.0
      %1936 = vmatpush1.msra.mxu0 0.0
      %1937 = vmatprep.subr.mxu0 0.0
      %1938 = vmatpush1.msra.mxu0 0.0
      %1939 = vmatprep.subr.mxu0 0.0
      %1940 = vmatpush1.msra.mxu0 0.0
      %1941 = vmatprep.subr.mxu0 0.0
      %1942 = vmatpush1.msra.mxu0 0.0
      %1943 = vmatprep.subr.mxu0 0.0
      %1944 = vmatpush1.msra.mxu0 0.0
      %1945 = vmatprep.subr.mxu0 0.0
      %1946 = vmatpush1.msra.mxu0 0.0
      %1947 = vmatprep.subr.mxu0 0.0
      %1948 = vmatpush1.msra.mxu0 0.0
      %1949 = vmatprep.subr.mxu0 0.0
      %1950 = vmatpush1.msra.mxu0 0.0
      %1951 = vmatprep.subr.mxu0 0.0
      %1952 = vmatpush1.msra.mxu0 0.0
      %1953 = vmatprep.subr.mxu0 0.0
      %1954 = vmatpush1.msra.mxu0 0.0
      %1955 = vmatprep.subr.mxu0 0.0
      %1956 = vmatpush1.msra.mxu0 0.0
      %1957 = vmatprep.subr.mxu0 0.0
      %1958 = vmatpush1.msra.mxu0 0.0
      %1959 = vmatprep.subr.mxu0 0.0
      %1960 = vmatpush1.msra.mxu0 0.0
      %1961 = vmatprep.subr.mxu0 0.0
      %1962 = vmatpush1.msra.mxu0 0.0
      %1963 = vmatprep.subr.mxu0 0.0
      %1964 = vmatpush1.msra.mxu0 0.0
      %1965 = vmatprep.mubr.f32.mxu0 0.0
      %1966 = vmatmul.mubr.f32.gmra.mrb[0].mxu0 %v1878
      %v1967 = vpop.f32.mrb[0].mxu0
      %v1968 = vadd.f32 %v390, %v1967
      %v1969 = vpop.f32.mrb[0].mxu0
      %1970 = vmatprep.mubr.f32.mxu0 0.0
      %1971 = vmatmul.mubr.f32.gmra.mrb[0].mxu0 %v1881
      %v1972 = vpop.f32.mrb[0].mxu0
      %v1973 = vadd.f32 %v390, %v1972
      %v1974 = vpop.f32.mrb[0].mxu0
      %1975 = vmatprep.mubr.f32.mxu0 0.0
      %1976 = vmatmul.mubr.f32.gmra.mrb[0].mxu0 %v1884
      %v1977 = vpop.f32.mrb[0].mxu0
      %v1978 = vadd.f32 %v390, %v1977
      %v1979 = vpop.f32.mrb[0].mxu0
      %1980 = vmatprep.mubr.f32.mxu0 0.0
      %1981 = vmatmul.mubr.f32.gmra.mrb[0].mxu0 %v1887
      %v1982 = vpop.f32.mrb[0].mxu0
      %v1983 = vadd.f32 %v390, %v1982
      %v1984 = vpop.f32.mrb[0].mxu0
      %1985 = vmatprep.mubr.f32.mxu0 0.0
      %1986 = vmatmul.mubr.f32.gmra.mrb[0].mxu0 %v1890
      %v1987 = vpop.f32.mrb[0].mxu0
      %v1988 = vadd.f32 %v390, %v1987
      %v1989 = vpop.f32.mrb[0].mxu0
      %1990 = vmatprep.mubr.f32.mxu0 0.0
      %1991 = vmatmul.mubr.f32.gmra.mrb[0].mxu0 %v1893
      %v1992 = vpop.f32.mrb[0].mxu0
      %v1993 = vadd.f32 %v390, %v1992
      %v1994 = vpop.f32.mrb[0].mxu0
      %1995 = vmatprep.mubr.f32.mxu0 0.0
      %1996 = vmatmul.mubr.f32.gmra.mrb[0].mxu0 %v1896
      %v1997 = vpop.f32.mrb[0].mxu0
      %v1998 = vadd.f32 %v390, %v1997
      %v1999 = vpop.f32.mrb[0].mxu0
      %2000 = vmatprep.mubr.f32.mxu0 0.0
      %2001 = vmatmul.mubr.f32.gmra.mrb[0].mxu0 %v1899
      %v2002 = vpop.f32.mrb[0].mxu0
      %v2003 = vadd.f32 %v390, %v2002
      %v2004 = vpop.f32.mrb[0].mxu0
      %2005 = vdwg.mxu0
      %v2006 = vmax.f32 %v1968, 0.0
      %v2007 = vmax.f32 %v1973, 0.0
      %v2008 = vmax.f32 %v1978, 0.0
      %v2009 = vmax.f32 %v1983, 0.0
      %v2010 = vmax.f32 %v1988, 0.0
      %v2011 = vmax.f32 %v1993, 0.0
      %v2012 = vmax.f32 %v1998, 0.0
      %v2013 = vmax.f32 %v2003, 0.0
      %v2015 = vsel %vm991, %v2006, 0
      %v2018 = vsel %vm991, %v2007, 0
      %v2021 = vsel %vm991, %v2008, 0
      %v2024 = vsel %vm991, %v2009, 0
      %v2027 = vsel %vm991, %v2010, 0
      %v2030 = vsel %vm991, %v2011, 0
      %v2033 = vsel %vm991, %v2012, 0
      %v2036 = vsel %vm991, %v2013, 0
      %2038 = vmatprep.subr.mxu0 0.0
      %2039 = vmatpush1.msra.mxu0 %v381
      %2040 = vmatprep.subr.mxu0 0.0
      %2041 = vmatpush1.msra.mxu0 %v382
      %2042 = vmatprep.subr.mxu0 0.0
      %2043 = vmatpush1.msra.mxu0 0.0
      %2044 = vmatprep.subr.mxu0 0.0
      %2045 = vmatpush1.msra.mxu0 0.0
      %2046 = vmatprep.subr.mxu0 0.0
      %2047 = vmatpush1.msra.mxu0 0.0
      %2048 = vmatprep.subr.mxu0 0.0
      %2049 = vmatpush1.msra.mxu0 0.0
      %2050 = vmatprep.subr.mxu0 0.0
      %2051 = vmatpush1.msra.mxu0 0.0
      %2052 = vmatprep.subr.mxu0 0.0
      %2053 = vmatpush1.msra.mxu0 0.0
      %2054 = vmatprep.subr.mxu0 0.0
      %2055 = vmatpush1.msra.mxu0 0.0
      %2056 = vmatprep.subr.mxu0 0.0
      %2057 = vmatpush1.msra.mxu0 0.0
      %2058 = vmatprep.subr.mxu0 0.0
      %2059 = vmatpush1.msra.mxu0 0.0
      %2060 = vmatprep.subr.mxu0 0.0
      %2061 = vmatpush1.msra.mxu0 0.0
      %2062 = vmatprep.subr.mxu0 0.0
      %2063 = vmatpush1.msra.mxu0 0.0
      %2064 = vmatprep.subr.mxu0 0.0
      %2065 = vmatpush1.msra.mxu0 0.0
      %2066 = vmatprep.subr.mxu0 0.0
      %2067 = vmatpush1.msra.mxu0 0.0
      %2068 = vmatprep.subr.mxu0 0.0
      %2069 = vmatpush1.msra.mxu0 0.0
      %2070 = vmatprep.subr.mxu0 0.0
      %2071 = vmatpush1.msra.mxu0 0.0
      %2072 = vmatprep.subr.mxu0 0.0
      %2073 = vmatpush1.msra.mxu0 0.0
      %2074 = vmatprep.subr.mxu0 0.0
      %2075 = vmatpush1.msra.mxu0 0.0
      %2076 = vmatprep.subr.mxu0 0.0
      %2077 = vmatpush1.msra.mxu0 0.0
      %2078 = vmatprep.subr.mxu0 0.0
      %2079 = vmatpush1.msra.mxu0 0.0
      %2080 = vmatprep.subr.mxu0 0.0
      %2081 = vmatpush1.msra.mxu0 0.0
      %2082 = vmatprep.subr.mxu0 0.0
      %2083 = vmatpush1.msra.mxu0 0.0
      %2084 = vmatprep.subr.mxu0 0.0
      %2085 = vmatpush1.msra.mxu0 0.0
      %2086 = vmatprep.subr.mxu0 0.0
      %2087 = vmatpush1.msra.mxu0 0.0
      %2088 = vmatprep.subr.mxu0 0.0
      %2089 = vmatpush1.msra.mxu0 0.0
      %2090 = vmatprep.subr.mxu0 0.0
      %2091 = vmatpush1.msra.mxu0 0.0
      %2092 = vmatprep.subr.mxu0 0.0
      %2093 = vmatpush1.msra.mxu0 0.0
      %2094 = vmatprep.subr.mxu0 0.0
      %2095 = vmatpush1.msra.mxu0 0.0
      %2096 = vmatprep.subr.mxu0 0.0
      %2097 = vmatpush1.msra.mxu0 0.0
      %2098 = vmatprep.subr.mxu0 0.0
      %2099 = vmatpush1.msra.mxu0 0.0
      %2100 = vmatprep.subr.mxu0 0.0
      %2101 = vmatpush1.msra.mxu0 0.0
      %2102 = vmatprep.mubr.f32.mxu0 0.0
      %2103 = vmatmul.mubr.f32.gmra.mrb[0].mxu0 %v2015
      %v2104 = vpop.f32.mrb[0].mxu0
      %v2105 = vadd.f32 %v391, %v2104
      %v2106 = vpop.f32.mrb[0].mxu0
      %2107 = vmatprep.mubr.f32.mxu0 0.0
      %2108 = vmatmul.mubr.f32.gmra.mrb[0].mxu0 %v2018
      %v2109 = vpop.f32.mrb[0].mxu0
      %v2110 = vadd.f32 %v391, %v2109
      %v2111 = vpop.f32.mrb[0].mxu0
      %2112 = vmatprep.mubr.f32.mxu0 0.0
      %2113 = vmatmul.mubr.f32.gmra.mrb[0].mxu0 %v2021
      %v2114 = vpop.f32.mrb[0].mxu0
      %v2115 = vadd.f32 %v391, %v2114
      %v2116 = vpop.f32.mrb[0].mxu0
      %2117 = vmatprep.mubr.f32.mxu0 0.0
      %2118 = vmatmul.mubr.f32.gmra.mrb[0].mxu0 %v2024
      %v2119 = vpop.f32.mrb[0].mxu0
      %v2120 = vadd.f32 %v391, %v2119
      %v2121 = vpop.f32.mrb[0].mxu0
      %2122 = vmatprep.mubr.f32.mxu0 0.0
      %2123 = vmatmul.mubr.f32.gmra.mrb[0].mxu0 %v2027
      %v2124 = vpop.f32.mrb[0].mxu0
      %v2125 = vadd.f32 %v391, %v2124
      %v2126 = vpop.f32.mrb[0].mxu0
      %2127 = vmatprep.mubr.f32.mxu0 0.0
      %2128 = vmatmul.mubr.f32.gmra.mrb[0].mxu0 %v2030
      %v2129 = vpop.f32.mrb[0].mxu0
      %v2130 = vadd.f32 %v391, %v2129
      %v2131 = vpop.f32.mrb[0].mxu0
      %2132 = vmatprep.mubr.f32.mxu0 0.0
      %2133 = vmatmul.mubr.f32.gmra.mrb[0].mxu0 %v2033
      %v2134 = vpop.f32.mrb[0].mxu0
      %v2135 = vadd.f32 %v391, %v2134
      %v2136 = vpop.f32.mrb[0].mxu0
      %2137 = vmatprep.mubr.f32.mxu0 0.0
      %2138 = vmatmul.mubr.f32.gmra.mrb[0].mxu0 %v2036
      %v2139 = vpop.f32.mrb[0].mxu0
      %v2140 = vadd.f32 %v391, %v2139
      %v2141 = vpop.f32.mrb[0].mxu0
      %2142 = vdwg.mxu0
      %v2143 = vxor.u32 %v2105, 2147483648
      %v2144 = vxor.u32 %v2110, 2147483648
      %v2145 = vxor.u32 %v2115, 2147483648
      %v2146 = vxor.u32 %v2120, 2147483648
      %v2147 = vxor.u32 %v2125, 2147483648
      %v2148 = vxor.u32 %v2130, 2147483648
      %v2149 = vxor.u32 %v2135, 2147483648
      %v2150 = vxor.u32 %v2140, 2147483648
      %v2151 = vmul.f32 %v2143, 1.442695
      %v2152 = vpow.pop %v2151
      %v2153 = vmul.f32 %v2144, 1.442695
      %v2154 = vpow.pop %v2153
      %v2155 = vmul.f32 %v2145, 1.442695
      %v2156 = vpow.pop %v2155
      %v2157 = vmul.f32 %v2146, 1.442695
      %v2158 = vpow.pop %v2157
      %v2159 = vmul.f32 %v2147, 1.442695
      %v2160 = vpow.pop %v2159
      %v2161 = vmul.f32 %v2148, 1.442695
      %v2162 = vpow.pop %v2161
      %v2163 = vmul.f32 %v2149, 1.442695
      %v2164 = vpow.pop %v2163
      %v2165 = vmul.f32 %v2150, 1.442695
      %v2166 = vpow.pop %v2165
      %v2167 = vadd.f32 %v2152, 1.0
      %v2168 = vadd.f32 %v2154, 1.0
      %v2169 = vadd.f32 %v2156, 1.0
      %v2170 = vadd.f32 %v2158, 1.0
      %v2171 = vadd.f32 %v2160, 1.0
      %v2172 = vadd.f32 %v2162, 1.0
      %v2173 = vadd.f32 %v2164, 1.0
      %v2174 = vadd.f32 %v2166, 1.0
      %v2175 = vrcp.pop %v2167
      %v2176 = vmul.f32 1.0, %v2175
      %v2177 = vrcp.pop %v2168
      %v2178 = vmul.f32 1.0, %v2177
      %v2179 = vrcp.pop %v2169
      %v2180 = vmul.f32 1.0, %v2179
      %v2181 = vrcp.pop %v2170
      %v2182 = vmul.f32 1.0, %v2181
      %v2183 = vrcp.pop %v2171
      %v2184 = vmul.f32 1.0, %v2183
      %v2185 = vrcp.pop %v2172
      %v2186 = vmul.f32 1.0, %v2185
      %v2187 = vrcp.pop %v2173
      %v2188 = vmul.f32 1.0, %v2187
      %v2189 = vrcp.pop %v2174
      %v2190 = vmul.f32 1.0, %v2189
      %2191 = vst.msk [vmem:[%s342] sm:$0xff] %vm562, %v1154
      %2192 = vst.msk [vmem:[%s342 + $0x8] sm:$0xff] %vm562, %v1156
      %2193 = vst.msk [vmem:[%s342 + $0x10] sm:$0xff] %vm562, %v1158
      %2194 = vst.msk [vmem:[%s342 + $0x18] sm:$0xff] %vm562, %v1160
      %2195 = vst.msk [vmem:[%s342 + $0x20] sm:$0xff] %vm562, %v1162
      %2196 = vst.msk [vmem:[%s342 + $0x28] sm:$0xff] %vm562, %v1164
      %2197 = vst.msk [vmem:[%s342 + $0x30] sm:$0xff] %vm562, %v1166
      %2198 = vst.msk [vmem:[%s342 + $0x38] sm:$0xff] %vm562, %v1168
      %2199 = vst.msk [vmem:[%s348] sm:$0xff] %vm562, %v2176
      %2200 = vst.msk [vmem:[%s348 + $0x8] sm:$0xff] %vm562, %v2178
      %2201 = vst.msk [vmem:[%s348 + $0x10] sm:$0xff] %vm562, %v2180
      %2202 = vst.msk [vmem:[%s348 + $0x18] sm:$0xff] %vm562, %v2182
      %2203 = vst.msk [vmem:[%s348 + $0x20] sm:$0xff] %vm562, %v2184
      %2204 = vst.msk [vmem:[%s348 + $0x28] sm:$0xff] %vm562, %v2186
      %2205 = vst.msk [vmem:[%s348 + $0x30] sm:$0xff] %vm562, %v2188
      %2206 = vst.msk [vmem:[%s348 + $0x38] sm:$0xff] %vm562, %v2190
      %s2207 = smul.u32 8, %s21
      %p2208 = scmp.lt.s32.totalorder %s2207, 15
      %s2209 = scalar_select %p2208, %s2207, 15
      %s2210 = smul.addr %s2209, 8
      %s2211 = scalar_lea.vmem %s8, %s2210
      %s2212 = smul.u32 8, %s21
      %p2213 = scmp.lt.s32.totalorder %s2212, 15
      %s2214 = scalar_select %p2213, %s2212, 15
      %s2215 = smul.addr %s2214, 8
      %s2216 = scalar_lea.vmem %s9, %s2215
      // Predicated region
      $region53: #{tpu_custom_call.1} parent=51 // pred_check
        %p2217 = pneg %p212
      $region54: #{tpu_custom_call.1} parent=51 // pred_check_branch
        %2219 = sbr.rel (%p2217) target = $region56
      $region55: #{tpu_custom_call.1} parent=51 // pred_region
        %s2220 = smul.u32 8, %s21
      $region56: #{tpu_custom_call.1} parent=51 // pred_fallthru
        _
      // Predicated region
      $region57: #{tpu_custom_call.1} parent=51 // pred_check
        %p2221 = pneg %p238
      $region58: #{tpu_custom_call.1} parent=51 // pred_check_branch
        %2223 = sbr.rel (%p2221) target = $region60
      $region59: #{tpu_custom_call.1} parent=51 // pred_region
        %s2224 = smul.u32 8, %s21
      $region60: #{tpu_custom_call.1} parent=51 // pred_fallthru
        _
    $region52: #{tpu_custom_call.1} parent=5 // pred_fallthru
      _
    %p2225 = scmp.le.s32.totalorder 2, %s16
    // Predicated region
    $region61: #{tpu_custom_call.1} parent=5 // pred_check
      %p2226 = pneg %p2225
    $region62: #{tpu_custom_call.1} parent=5 // pred_check_branch
      %2228 = sbr.rel (%p2226) target = $region64
    $region63: #{tpu_custom_call.1} parent=5 // pred_region
      %s2229 = ssub.s32 %s16, 2
      // Predicated region
      $region65: #{tpu_custom_call.1} parent=63 // pred_check
        %p2230 = pneg %p218
      $region66: #{tpu_custom_call.1} parent=63 // pred_check_branch
        %2232 = sbr.rel (%p2230) target = $region68
      $region67: #{tpu_custom_call.1} parent=63 // pred_region
        %s2233 = smul.u32 8, %s22
        %p2234 = scmp.lt.s32.totalorder %s2233, 15
        %s2235 = scalar_select %p2234, %s2233, 15
        %s2236 = smul.addr %s2235, 8
        %s2237 = scalar_lea.vmem %s8, %s2236
      $region68: #{tpu_custom_call.1} parent=63 // pred_fallthru
        _
      // Predicated region
      $region69: #{tpu_custom_call.1} parent=63 // pred_check
        %p2238 = pneg %p244
      $region70: #{tpu_custom_call.1} parent=63 // pred_check_branch
        %2240 = sbr.rel (%p2238) target = $region72
      $region71: #{tpu_custom_call.1} parent=63 // pred_region
        %s2241 = smul.u32 8, %s22
        %p2242 = scmp.lt.s32.totalorder %s2241, 15
        %s2243 = scalar_select %p2242, %s2241, 15
        %s2244 = smul.addr %s2243, 8
        %s2245 = scalar_lea.vmem %s9, %s2244
      $region72: #{tpu_custom_call.1} parent=63 // pred_fallthru
        _
    $region64: #{tpu_custom_call.1} parent=5 // pred_fallthru
      _
  $region6: #{tpu_custom_call.1} parent=0 // loop_footer
    %s20 = sadd.s32 1, %s16
  $region7: #{tpu_custom_call.1} parent=0 // loop_footer_branch
    %15 = sbr.rel target = $region3
  $region8: #{tpu_custom_call.1} parent=0 // loop_exit
    _

</llo_original>
